<compile_context>
chip_gen: v5e
topology: v5e:2x2
jax: 0.10.0
libtpu: 0.0.40
codegen_flags: <defaults>
</compile_context>

<pallas_src>
import functools

import jax
import jax.numpy as jnp
from jax import lax
from jax.experimental import pallas as pl
from jax.experimental.pallas import tpu as pltpu

EPS = 1e-5
LANE = 128


def _bn(h, gamma=None, beta=None):
    """BatchNorm1d, training mode: batch mean / biased batch variance."""
    mu = jnp.mean(h, axis=0, keepdims=True)
    var = jnp.mean((h - mu) ** 2, axis=0, keepdims=True)
    hn = (h - mu) * lax.rsqrt(var + EPS)
    if gamma is not None:
        hn = hn * gamma + beta
    return hn


def _round_up(n, m=LANE):
    return ((n + m - 1) // m) * m


def _pick_spatial_tile(hw):
    """Largest lane-aligned spatial tile dividing H*W that leaves >=2 grid steps."""
    for ts in (2048, 1024, 512, 256, 128):
        if hw % ts == 0 and hw // ts >= 2:
            return ts
    return hw


def simsiam_kernel(
    x_ref,                      # (B, C, TS)          spatial tile of the NCHW input
    wc_ref,                     # (C, prev_dim, 1)    backbone 1x1 conv
    w1_ref, g1_ref, b1_ref,     # projector layer 1   Linear(no bias) + BN affine
    w2_ref, g2_ref, b2_ref,     # projector layer 2
    w3_ref, b3_ref,             # original encoder.fc Linear(prev_dim, dim) + bias
    wp1_ref, g4_ref, b4_ref,    # predictor layer 1
    wp2_ref, bp2_ref,           # predictor layer 2
    p_ref, z_ref,               # outputs (B, dim_pad), lane-dense
    f_acc,                      # VMEM scratch (B, prev_dim): running spatial sum
    *, inv_hw,
):
    step = pl.program_id(0)

    @pl.when(step == 0)
    def _init():
        f_acc[...] = jnp.zeros_like(f_acc)

    # ---- backbone stem on this spatial tile --------------------------------
    # Pointwise conv as C broadcast-FMAs on the VPU (spatial on the lane axis),
    # then ReLU, then a running spatial sum into the (B, prev_dim) accumulator.
    x = x_ref[...].astype(jnp.float32)          # (B, C, TS)
    wc = wc_ref[...].astype(jnp.float32)        # (C, prev_dim, 1)
    n_ch = x.shape[1]
    y = x[:, 0:1, :] * wc[0:1]                  # (B, prev_dim, TS)
    for c in range(1, n_ch):                    # C is tiny (static unroll)
        y = y + x[:, c:c + 1, :] * wc[c:c + 1]
    y = jnp.maximum(y, 0.0)                     # ReLU
    f_acc[...] += jnp.sum(y, axis=-1)           # lane-axis reduce -> (B, prev_dim)

    # ---- projector + predictor MLP, once all spatial tiles are summed ------
    @pl.when(step == pl.num_programs(0) - 1)
    def _finalize():
        f = f_acc[...] * inv_hw                 # global average pool  (B, prev_dim)

        # projector: Lin->BN->ReLU, Lin->BN->ReLU, Lin(+bias)->BN(affine=False)
        h = jnp.dot(f, w1_ref[...], preferred_element_type=jnp.float32)
        h = jnp.maximum(_bn(h, g1_ref[...], b1_ref[...]), 0.0)
        h = jnp.dot(h, w2_ref[...], preferred_element_type=jnp.float32)
        h = jnp.maximum(_bn(h, g2_ref[...], b2_ref[...]), 0.0)
        z = jnp.dot(h, w3_ref[...], preferred_element_type=jnp.float32) + b3_ref[...]
        z = _bn(z)                              # affine=False

        # predictor: Lin->BN->ReLU, Lin(+bias)
        q = jnp.dot(z, wp1_ref[...], preferred_element_type=jnp.float32)
        q = jnp.maximum(_bn(q, g4_ref[...], b4_ref[...]), 0.0)
        p = jnp.dot(q, wp2_ref[...], preferred_element_type=jnp.float32) + bp2_ref[...]

        p_ref[...] = p.astype(p_ref.dtype)
        z_ref[...] = z.astype(z_ref.dtype)      # z1.detach() — no grads here anyway


def _pad2(a, rows, cols):
    return jnp.pad(a, ((0, rows - a.shape[0]), (0, cols - a.shape[1])))


def _const_spec(shape):
    nd = len(shape)
    return pl.BlockSpec(shape, lambda i, _nd=nd: (0,) * _nd)


@jax.jit
def simsiam_forward(x_nchw, params):
    B, C, H, W = x_nchw.shape
    HW = H * W
    prev_dim = params['wc'].shape[1]
    dim = params['w3'].shape[1]
    pred_dim = params['wp1'].shape[1]
    P1, PD, PP = _round_up(prev_dim), _round_up(dim), _round_up(pred_dim)

    # Free reshape of NCHW (no transpose through HBM): spatial rides the lanes.
    # TODO(synk): on v6e/v7x a bf16 input would halve stem HBM traffic; kept f32
    # to match the reference module's dtype exactly.
    x_flat = x_nchw.reshape(B, C, HW)

    # 1x1-conv weight carried as (C, prev_dim, 1) so wc[c] is already in
    # (sublane=prev_dim, lane=1) layout for the in-kernel broadcast-FMA.
    wc3 = params['wc'][:, :, None]

    # Zero-pad MLP feature dims to 128 lanes (lane-dense matmuls / BN / stores).
    w1 = _pad2(params['w1'], prev_dim, P1)
    g1 = _pad2(params['g1'], 1, P1)
    b1 = _pad2(params['b1'], 1, P1)
    w2 = _pad2(params['w2'], P1, P1)
    g2 = _pad2(params['g2'], 1, P1)
    b2 = _pad2(params['b2'], 1, P1)
    w3 = _pad2(params['w3'], P1, PD)
    b3 = _pad2(params['b3'], 1, PD)
    wp1 = _pad2(params['wp1'], PD, PP)
    g4 = _pad2(params['g4'], 1, PP)
    b4 = _pad2(params['b4'], 1, PP)
    wp2 = _pad2(params['wp2'], PP, PD)
    bp2 = _pad2(params['bp2'], 1, PD)

    args = (x_flat, wc3, w1, g1, b1, w2, g2, b2, w3, b3, wp1, g4, b4, wp2, bp2)

    ts = _pick_spatial_tile(HW)
    grid = (HW // ts,)

    in_specs = [pl.BlockSpec((B, C, ts), lambda i: (0, 0, i))]
    in_specs += [_const_spec(a.shape) for a in args[1:]]
    out_specs = (pl.BlockSpec((B, PD), lambda i: (0, 0)),
                 pl.BlockSpec((B, PD), lambda i: (0, 0)))
    out_shape = (jax.ShapeDtypeStruct((B, PD), jnp.float32),
                 jax.ShapeDtypeStruct((B, PD), jnp.float32))

    flops = 2 * B * HW * C * prev_dim + 2 * B * (
        prev_dim * P1 + P1 * P1 + P1 * PD + PD * PP + PP * PD)
    bytes_accessed = 4 * (x_flat.size + sum(int(a.size) for a in args[1:]) + 2 * B * PD)

    kernel = functools.partial(simsiam_kernel, inv_hw=1.0 / HW)

    p_pad, z_pad = pl.pallas_call(
        kernel,
        out_shape=out_shape,
        grid_spec=pltpu.PrefetchScalarGridSpec(
            num_scalar_prefetch=0,
            grid=grid,
            in_specs=in_specs,
            out_specs=out_specs,
            scratch_shapes=[pltpu.VMEM((B, prev_dim), jnp.float32)],
        ),
        compiler_params=pltpu.CompilerParams(
            # Single reduction axis over spatial tiles -> "arbitrary".  The two
            # SimSiam views give the natural parallel axis at the caller level.
            dimension_semantics=("arbitrary",),
            vmem_limit_bytes=48 * 1024 * 1024,   # fits v7x's 64 MiB VMEM
        ),
        cost_estimate=pl.CostEstimate(
            flops=int(flops),
            transcendentals=int(5 * B * max(P1, PD, PP)),
            bytes_accessed=int(bytes_accessed),
        ),
    )(*args)

    return p_pad[:, :dim], z_pad[:, :dim]


def make_params(key, *, in_ch, prev_dim, dim, pred_dim):
    ks = jax.random.split(key, 8)

    def lin(k, fan_in, fan_out):
        scale = 1.0 / jnp.sqrt(jnp.float32(fan_in))
        return jax.random.uniform(k, (fan_in, fan_out), jnp.float32, -scale, scale)

    return {
        'wc':  lin(ks[0], in_ch, prev_dim),
        'w1':  lin(ks[1], prev_dim, prev_dim),
        'g1':  jnp.ones((1, prev_dim), jnp.float32),
        'b1':  jnp.zeros((1, prev_dim), jnp.float32),
        'w2':  lin(ks[2], prev_dim, prev_dim),
        'g2':  jnp.ones((1, prev_dim), jnp.float32),
        'b2':  jnp.zeros((1, prev_dim), jnp.float32),
        'w3':  lin(ks[3], prev_dim, dim),
        'b3':  jax.random.uniform(ks[4], (1, dim), jnp.float32, -0.05, 0.05),
        'wp1': lin(ks[5], dim, pred_dim),
        'g4':  jnp.ones((1, pred_dim), jnp.float32),
        'b4':  jnp.zeros((1, pred_dim), jnp.float32),
        'wp2': lin(ks[6], pred_dim, dim),
        'bp2': jax.random.uniform(ks[7], (1, dim), jnp.float32, -0.05, 0.05),
    }


def reference_forward(x_nchw, params):
    """Pure-JAX reference with identical semantics (for correctness check)."""
    B, C, H, W = x_nchw.shape
    x_p = jnp.transpose(x_nchw, (0, 2, 3, 1)).reshape(B, H * W, C)
    y = jnp.maximum(jnp.einsum('bsc,cp->bsp', x_p, params['wc']), 0.0)
    f = jnp.mean(y, axis=1)
    h = jnp.maximum(_bn(f @ params['w1'], params['g1'], params['b1']), 0.0)
    h = jnp.maximum(_bn(h @ params['w2'], params['g2'], params['b2']), 0.0)
    z = _bn(h @ params['w3'] + params['b3'])
    q = jnp.maximum(_bn(z @ params['wp1'], params['g4'], params['b4']), 0.0)
    p = q @ params['wp2'] + params['bp2']
    return p, z


if __name__ == "__main__":
    # Small, SimSiam-consistent shapes.
    B, C, H, W = 8, 4, 16, 16
    prev_dim, dim, pred_dim = 32, 64, 16

    key = jax.random.PRNGKey(0)
    kx, kp = jax.random.split(key)
    x = jax.random.normal(kx, (B, C, H, W), jnp.float32)
    params = make_params(kp, in_ch=C, prev_dim=prev_dim, dim=dim, pred_dim=pred_dim)

    p1, z1 = simsiam_forward(x, params)
    jax.block_until_ready((p1, z1))

    p_ref, z_ref = reference_forward(x, params)
    assert p1.shape == (B, dim) and z1.shape == (B, dim)
    assert jnp.allclose(p1, p_ref, atol=1e-3, rtol=1e-3), \
        float(jnp.max(jnp.abs(p1 - p_ref)))
    assert jnp.allclose(z1, z_ref, atol=1e-3, rtol=1e-3), \
        float(jnp.max(jnp.abs(z1 - z_ref)))

    print("KERNEL_OK")
</pallas_src>

<mosaic_0001>
module attributes {stable_mosaic.version = 11 : i64} {
  func.func @simsiam_kernel(%arg0: i32, %arg1: memref<8x4x128xf32, #tpu.memory_space<vmem>>, %arg2: memref<4x32x1xf32, #tpu.memory_space<vmem>>, %arg3: memref<32x128xf32, #tpu.memory_space<vmem>>, %arg4: memref<1x128xf32, #tpu.memory_space<vmem>>, %arg5: memref<1x128xf32, #tpu.memory_space<vmem>>, %arg6: memref<128x128xf32, #tpu.memory_space<vmem>>, %arg7: memref<1x128xf32, #tpu.memory_space<vmem>>, %arg8: memref<1x128xf32, #tpu.memory_space<vmem>>, %arg9: memref<128x128xf32, #tpu.memory_space<vmem>>, %arg10: memref<1x128xf32, #tpu.memory_space<vmem>>, %arg11: memref<128x128xf32, #tpu.memory_space<vmem>>, %arg12: memref<1x128xf32, #tpu.memory_space<vmem>>, %arg13: memref<1x128xf32, #tpu.memory_space<vmem>>, %arg14: memref<128x128xf32, #tpu.memory_space<vmem>>, %arg15: memref<1x128xf32, #tpu.memory_space<vmem>>, %arg16: memref<8x128xf32, #tpu.memory_space<vmem>>, %arg17: memref<8x128xf32, #tpu.memory_space<vmem>>, %arg18: memref<8x32xf32, #tpu.memory_space<vmem>>) attributes {dimension_semantics = [#tpu.dimension_semantics<arbitrary>], iteration_bounds = array<i64: 2>, scalar_prefetch = 0 : i64, scratch_operands = 1 : i64, tpu.core_type = #tpu.core_type<tc>, window_params = [{transform_indices = @transform_0, window_bounds = array<i64: 8, 4, 128>}, {pipeline_mode = #tpu.pipeline_mode<synchronous>, transform_indices = @transform_1, window_bounds = array<i64: 4, 32, 1>}, {pipeline_mode = #tpu.pipeline_mode<synchronous>, transform_indices = @transform_2, window_bounds = array<i64: 32, 128>}, {pipeline_mode = #tpu.pipeline_mode<synchronous>, transform_indices = @transform_3, window_bounds = array<i64: 1, 128>}, {pipeline_mode = #tpu.pipeline_mode<synchronous>, transform_indices = @transform_4, window_bounds = array<i64: 1, 128>}, {pipeline_mode = #tpu.pipeline_mode<synchronous>, transform_indices = @transform_5, window_bounds = array<i64: 128, 128>}, {pipeline_mode = #tpu.pipeline_mode<synchronous>, transform_indices = @transform_6, window_bounds = array<i64: 1, 128>}, {pipeline_mode = #tpu.pipeline_mode<synchronous>, transform_indices = @transform_7, window_bounds = array<i64: 1, 128>}, {pipeline_mode = #tpu.pipeline_mode<synchronous>, transform_indices = @transform_8, window_bounds = array<i64: 128, 128>}, {pipeline_mode = #tpu.pipeline_mode<synchronous>, transform_indices = @transform_9, window_bounds = array<i64: 1, 128>}, {pipeline_mode = #tpu.pipeline_mode<synchronous>, transform_indices = @transform_10, window_bounds = array<i64: 128, 128>}, {pipeline_mode = #tpu.pipeline_mode<synchronous>, transform_indices = @transform_11, window_bounds = array<i64: 1, 128>}, {pipeline_mode = #tpu.pipeline_mode<synchronous>, transform_indices = @transform_12, window_bounds = array<i64: 1, 128>}, {pipeline_mode = #tpu.pipeline_mode<synchronous>, transform_indices = @transform_13, window_bounds = array<i64: 128, 128>}, {pipeline_mode = #tpu.pipeline_mode<synchronous>, transform_indices = @transform_14, window_bounds = array<i64: 1, 128>}, {pipeline_mode = #tpu.pipeline_mode<synchronous>, transform_indices = @transform_15, window_bounds = array<i64: 8, 128>}, {pipeline_mode = #tpu.pipeline_mode<synchronous>, transform_indices = @transform_16, window_bounds = array<i64: 8, 128>}]} {
    %c0_i32 = arith.constant 0 : i32
    %0 = arith.cmpi eq, %arg0, %c0_i32 : i32
    %1 = arith.extui %0 : i1 to i32
    %c0_i32_0 = arith.constant 0 : i32
    %2 = arith.cmpi ne, %1, %c0_i32_0 : i32
    scf.if %2 {
      %cst_12 = arith.constant 0.000000e+00 : f32
      %37 = vector.broadcast %cst_12 : f32 to vector<8x32xf32>
      %c0_13 = arith.constant 0 : index
      %c0_14 = arith.constant 0 : index
      %38 = vector.load %arg18[%c0_13, %c0_14] : memref<8x32xf32, #tpu.memory_space<vmem>>, vector<8x32xf32>
      tpu.vector_store %arg18[%c0_13, %c0_14], %37 {strides = array<i32>} : memref<8x32xf32, #tpu.memory_space<vmem>>, vector<8x32xf32>,
    } else {
    }
    %c0 = arith.constant 0 : index
    %c0_1 = arith.constant 0 : index
    %c0_2 = arith.constant 0 : index
    %3 = vector.load %arg1[%c0, %c0_1, %c0_2] : memref<8x4x128xf32, #tpu.memory_space<vmem>>, vector<8x4x128xf32>
    %c0_3 = arith.constant 0 : index
    %c0_4 = arith.constant 0 : index
    %c0_5 = arith.constant 0 : index
    %4 = vector.load %arg2[%c0_3, %c0_4, %c0_5] : memref<4x32x1xf32, #tpu.memory_space<vmem>>, vector<4x32x1xf32>
    %5 = vector.extract_strided_slice %3 {offsets = [0, 0, 0], sizes = [8, 1, 128], strides = [1, 1, 1]} : vector<8x4x128xf32> to vector<8x1x128xf32>
    %6 = vector.extract_strided_slice %4 {offsets = [0, 0, 0], sizes = [1, 32, 1], strides = [1, 1, 1]} : vector<4x32x1xf32> to vector<1x32x1xf32>
    %7 = vector.broadcast %5 : vector<8x1x128xf32> to vector<8x32x128xf32>
    %8 = vector.broadcast %6 : vector<1x32x1xf32> to vector<8x32x128xf32>
    %9 = arith.mulf %7, %8 : vector<8x32x128xf32>
    %10 = vector.extract_strided_slice %3 {offsets = [0, 1, 0], sizes = [8, 1, 128], strides = [1, 1, 1]} : vector<8x4x128xf32> to vector<8x1x128xf32>
    %11 = vector.extract_strided_slice %4 {offsets = [1, 0, 0], sizes = [1, 32, 1], strides = [1, 1, 1]} : vector<4x32x1xf32> to vector<1x32x1xf32>
    %12 = vector.broadcast %10 : vector<8x1x128xf32> to vector<8x32x128xf32>
    %13 = vector.broadcast %11 : vector<1x32x1xf32> to vector<8x32x128xf32>
    %14 = arith.mulf %12, %13 : vector<8x32x128xf32>
    %15 = arith.addf %9, %14 : vector<8x32x128xf32>
    %16 = vector.extract_strided_slice %3 {offsets = [0, 2, 0], sizes = [8, 1, 128], strides = [1, 1, 1]} : vector<8x4x128xf32> to vector<8x1x128xf32>
    %17 = vector.extract_strided_slice %4 {offsets = [2, 0, 0], sizes = [1, 32, 1], strides = [1, 1, 1]} : vector<4x32x1xf32> to vector<1x32x1xf32>
    %18 = vector.broadcast %16 : vector<8x1x128xf32> to vector<8x32x128xf32>
    %19 = vector.broadcast %17 : vector<1x32x1xf32> to vector<8x32x128xf32>
    %20 = arith.mulf %18, %19 : vector<8x32x128xf32>
    %21 = arith.addf %15, %20 : vector<8x32x128xf32>
    %22 = vector.extract_strided_slice %3 {offsets = [0, 3, 0], sizes = [8, 1, 128], strides = [1, 1, 1]} : vector<8x4x128xf32> to vector<8x1x128xf32>
    %23 = vector.extract_strided_slice %4 {offsets = [3, 0, 0], sizes = [1, 32, 1], strides = [1, 1, 1]} : vector<4x32x1xf32> to vector<1x32x1xf32>
    %24 = vector.broadcast %22 : vector<8x1x128xf32> to vector<8x32x128xf32>
    %25 = vector.broadcast %23 : vector<1x32x1xf32> to vector<8x32x128xf32>
    %26 = arith.mulf %24, %25 : vector<8x32x128xf32>
    %27 = arith.addf %21, %26 : vector<8x32x128xf32>
    %cst = arith.constant 0.000000e+00 : f32
    %28 = vector.broadcast %cst : f32 to vector<8x32x128xf32>
    %29 = arith.maximumf %27, %28 : vector<8x32x128xf32>
    %c0_6 = arith.constant 0 : index
    %c0_7 = arith.constant 0 : index
    %30 = vector.load %arg18[%c0_6, %c0_7] : memref<8x32xf32, #tpu.memory_space<vmem>>, vector<8x32xf32>
    %cst_8 = arith.constant dense<0.000000e+00> : vector<8x32xf32>
    %31 = vector.multi_reduction <add>, %29, %cst_8 [2] : vector<8x32x128xf32> to vector<8x32xf32>
    %32 = arith.addf %30, %31 : vector<8x32xf32>
    %c0_9 = arith.constant 0 : index
    %c0_10 = arith.constant 0 : index
    %33 = vector.load %arg18[%c0_9, %c0_10] : memref<8x32xf32, #tpu.memory_space<vmem>>, vector<8x32xf32>
    tpu.vector_store %arg18[%c0_9, %c0_10], %32 {strides = array<i32>} : memref<8x32xf32, #tpu.memory_space<vmem>>, vector<8x32xf32>,
    %c1_i32 = arith.constant 1 : i32
    %34 = arith.cmpi eq, %arg0, %c1_i32 : i32
    %35 = arith.extui %34 : i1 to i32
    %c0_i32_11 = arith.constant 0 : i32
    %36 = arith.cmpi ne, %35, %c0_i32_11 : i32
    scf.if %36 {
      %c0_12 = arith.constant 0 : index
      %c0_13 = arith.constant 0 : index
      %37 = vector.load %arg18[%c0_12, %c0_13] : memref<8x32xf32, #tpu.memory_space<vmem>>, vector<8x32xf32>
      %cst_14 = arith.constant 3.906250e-03 : f32
      %38 = vector.broadcast %cst_14 : f32 to vector<8x32xf32>
      %39 = arith.mulf %37, %38 : vector<8x32xf32>
      %c0_15 = arith.constant 0 : index
      %c0_16 = arith.constant 0 : index
      %40 = vector.load %arg3[%c0_15, %c0_16] : memref<32x128xf32, #tpu.memory_space<vmem>>, vector<32x128xf32>
      %cst_17 = arith.constant dense<0.000000e+00> : vector<8x128xf32>
      %41 = tpu.matmul %39, %40, %cst_17 {dimension_numbers = #tpu.dot_dimension_numbers<[1], [0], [0], [1], [0, 0, 1, 1], [], []>} : vector<8x32xf32>, vector<32x128xf32>, vector<8x128xf32> -> vector<8x128xf32>
      %c0_18 = arith.constant 0 : index
      %c0_19 = arith.constant 0 : index
      %42 = vector.load %arg4[%c0_18, %c0_19] : memref<1x128xf32, #tpu.memory_space<vmem>>, vector<1x128xf32>
      %c0_20 = arith.constant 0 : index
      %c0_21 = arith.constant 0 : index
      %43 = vector.load %arg5[%c0_20, %c0_21] : memref<1x128xf32, #tpu.memory_space<vmem>>, vector<1x128xf32>
      %cst_22 = arith.constant dense<0.000000e+00> : vector<128xf32>
      %44 = vector.multi_reduction <add>, %41, %cst_22 [0] : vector<8x128xf32> to vector<128xf32>
      %45 = vector.shape_cast %44 : vector<128xf32> to vector<1x128xf32>
      %cst_23 = arith.constant 8.000000e+00 : f32
      %46 = vector.broadcast %cst_23 : f32 to vector<1x128xf32>
      %47 = arith.divf %45, %46 : vector<1x128xf32>
      %48 = vector.broadcast %47 : vector<1x128xf32> to vector<8x128xf32>
      %49 = arith.subf %41, %48 : vector<8x128xf32>
      %50 = arith.mulf %49, %49 : vector<8x128xf32>
      %cst_24 = arith.constant dense<0.000000e+00> : vector<128xf32>
      %51 = vector.multi_reduction <add>, %50, %cst_24 [0] : vector<8x128xf32> to vector<128xf32>
      %52 = vector.shape_cast %51 : vector<128xf32> to vector<1x128xf32>
      %cst_25 = arith.constant 8.000000e+00 : f32
      %53 = vector.broadcast %cst_25 : f32 to vector<1x128xf32>
      %54 = arith.divf %52, %53 : vector<1x128xf32>
      %55 = vector.broadcast %47 : vector<1x128xf32> to vector<8x128xf32>
      %56 = arith.subf %41, %55 : vector<8x128xf32>
      %cst_26 = arith.constant 9.99999974E-6 : f32
      %57 = vector.broadcast %cst_26 : f32 to vector<1x128xf32>
      %58 = arith.addf %54, %57 : vector<1x128xf32>
      %59 = math.rsqrt %58 : vector<1x128xf32>
      %60 = vector.broadcast %59 : vector<1x128xf32> to vector<8x128xf32>
      %61 = arith.mulf %56, %60 : vector<8x128xf32>
      %62 = vector.broadcast %42 : vector<1x128xf32> to vector<8x128xf32>
      %63 = arith.mulf %61, %62 : vector<8x128xf32>
      %64 = vector.broadcast %43 : vector<1x128xf32> to vector<8x128xf32>
      %65 = arith.addf %63, %64 : vector<8x128xf32>
      %cst_27 = arith.constant 0.000000e+00 : f32
      %66 = vector.broadcast %cst_27 : f32 to vector<8x128xf32>
      %67 = arith.maximumf %65, %66 : vector<8x128xf32>
      %c0_28 = arith.constant 0 : index
      %c0_29 = arith.constant 0 : index
      %68 = vector.load %arg6[%c0_28, %c0_29] : memref<128x128xf32, #tpu.memory_space<vmem>>, vector<128x128xf32>
      %cst_30 = arith.constant dense<0.000000e+00> : vector<8x128xf32>
      %69 = tpu.matmul %67, %68, %cst_30 {dimension_numbers = #tpu.dot_dimension_numbers<[1], [0], [0], [1], [0, 0, 1, 1], [], []>} : vector<8x128xf32>, vector<128x128xf32>, vector<8x128xf32> -> vector<8x128xf32>
      %c0_31 = arith.constant 0 : index
      %c0_32 = arith.constant 0 : index
      %70 = vector.load %arg7[%c0_31, %c0_32] : memref<1x128xf32, #tpu.memory_space<vmem>>, vector<1x128xf32>
      %c0_33 = arith.constant 0 : index
      %c0_34 = arith.constant 0 : index
      %71 = vector.load %arg8[%c0_33, %c0_34] : memref<1x128xf32, #tpu.memory_space<vmem>>, vector<1x128xf32>
      %cst_35 = arith.constant dense<0.000000e+00> : vector<128xf32>
      %72 = vector.multi_reduction <add>, %69, %cst_35 [0] : vector<8x128xf32> to vector<128xf32>
      %73 = vector.shape_cast %72 : vector<128xf32> to vector<1x128xf32>
      %cst_36 = arith.constant 8.000000e+00 : f32
      %74 = vector.broadcast %cst_36 : f32 to vector<1x128xf32>
      %75 = arith.divf %73, %74 : vector<1x128xf32>
      %76 = vector.broadcast %75 : vector<1x128xf32> to vector<8x128xf32>
      %77 = arith.subf %69, %76 : vector<8x128xf32>
      %78 = arith.mulf %77, %77 : vector<8x128xf32>
      %cst_37 = arith.constant dense<0.000000e+00> : vector<128xf32>
      %79 = vector.multi_reduction <add>, %78, %cst_37 [0] : vector<8x128xf32> to vector<128xf32>
      %80 = vector.shape_cast %79 : vector<128xf32> to vector<1x128xf32>
      %cst_38 = arith.constant 8.000000e+00 : f32
      %81 = vector.broadcast %cst_38 : f32 to vector<1x128xf32>
      %82 = arith.divf %80, %81 : vector<1x128xf32>
      %83 = vector.broadcast %75 : vector<1x128xf32> to vector<8x128xf32>
      %84 = arith.subf %69, %83 : vector<8x128xf32>
      %cst_39 = arith.constant 9.99999974E-6 : f32
      %85 = vector.broadcast %cst_39 : f32 to vector<1x128xf32>
      %86 = arith.addf %82, %85 : vector<1x128xf32>
      %87 = math.rsqrt %86 : vector<1x128xf32>
      %88 = vector.broadcast %87 : vector<1x128xf32> to vector<8x128xf32>
      %89 = arith.mulf %84, %88 : vector<8x128xf32>
      %90 = vector.broadcast %70 : vector<1x128xf32> to vector<8x128xf32>
      %91 = arith.mulf %89, %90 : vector<8x128xf32>
      %92 = vector.broadcast %71 : vector<1x128xf32> to vector<8x128xf32>
      %93 = arith.addf %91, %92 : vector<8x128xf32>
      %cst_40 = arith.constant 0.000000e+00 : f32
      %94 = vector.broadcast %cst_40 : f32 to vector<8x128xf32>
      %95 = arith.maximumf %93, %94 : vector<8x128xf32>
      %c0_41 = arith.constant 0 : index
      %c0_42 = arith.constant 0 : index
      %96 = vector.load %arg9[%c0_41, %c0_42] : memref<128x128xf32, #tpu.memory_space<vmem>>, vector<128x128xf32>
      %cst_43 = arith.constant dense<0.000000e+00> : vector<8x128xf32>
      %97 = tpu.matmul %95, %96, %cst_43 {dimension_numbers = #tpu.dot_dimension_numbers<[1], [0], [0], [1], [0, 0, 1, 1], [], []>} : vector<8x128xf32>, vector<128x128xf32>, vector<8x128xf32> -> vector<8x128xf32>
      %c0_44 = arith.constant 0 : index
      %c0_45 = arith.constant 0 : index
      %98 = vector.load %arg10[%c0_44, %c0_45] : memref<1x128xf32, #tpu.memory_space<vmem>>, vector<1x128xf32>
      %99 = vector.broadcast %98 : vector<1x128xf32> to vector<8x128xf32>
      %100 = arith.addf %97, %99 : vector<8x128xf32>
      %cst_46 = arith.constant dense<0.000000e+00> : vector<128xf32>
      %101 = vector.multi_reduction <add>, %100, %cst_46 [0] : vector<8x128xf32> to vector<128xf32>
      %102 = vector.shape_cast %101 : vector<128xf32> to vector<1x128xf32>
      %cst_47 = arith.constant 8.000000e+00 : f32
      %103 = vector.broadcast %cst_47 : f32 to vector<1x128xf32>
      %104 = arith.divf %102, %103 : vector<1x128xf32>
      %105 = vector.broadcast %104 : vector<1x128xf32> to vector<8x128xf32>
      %106 = arith.subf %100, %105 : vector<8x128xf32>
      %107 = arith.mulf %106, %106 : vector<8x128xf32>
      %cst_48 = arith.constant dense<0.000000e+00> : vector<128xf32>
      %108 = vector.multi_reduction <add>, %107, %cst_48 [0] : vector<8x128xf32> to vector<128xf32>
      %109 = vector.shape_cast %108 : vector<128xf32> to vector<1x128xf32>
      %cst_49 = arith.constant 8.000000e+00 : f32
      %110 = vector.broadcast %cst_49 : f32 to vector<1x128xf32>
      %111 = arith.divf %109, %110 : vector<1x128xf32>
      %112 = vector.broadcast %104 : vector<1x128xf32> to vector<8x128xf32>
      %113 = arith.subf %100, %112 : vector<8x128xf32>
      %cst_50 = arith.constant 9.99999974E-6 : f32
      %114 = vector.broadcast %cst_50 : f32 to vector<1x128xf32>
      %115 = arith.addf %111, %114 : vector<1x128xf32>
      %116 = math.rsqrt %115 : vector<1x128xf32>
      %117 = vector.broadcast %116 : vector<1x128xf32> to vector<8x128xf32>
      %118 = arith.mulf %113, %117 : vector<8x128xf32>
      %c0_51 = arith.constant 0 : index
      %c0_52 = arith.constant 0 : index
      %119 = vector.load %arg11[%c0_51, %c0_52] : memref<128x128xf32, #tpu.memory_space<vmem>>, vector<128x128xf32>
      %cst_53 = arith.constant dense<0.000000e+00> : vector<8x128xf32>
      %120 = tpu.matmul %118, %119, %cst_53 {dimension_numbers = #tpu.dot_dimension_numbers<[1], [0], [0], [1], [0, 0, 1, 1], [], []>} : vector<8x128xf32>, vector<128x128xf32>, vector<8x128xf32> -> vector<8x128xf32>
      %c0_54 = arith.constant 0 : index
      %c0_55 = arith.constant 0 : index
      %121 = vector.load %arg12[%c0_54, %c0_55] : memref<1x128xf32, #tpu.memory_space<vmem>>, vector<1x128xf32>
      %c0_56 = arith.constant 0 : index
      %c0_57 = arith.constant 0 : index
      %122 = vector.load %arg13[%c0_56, %c0_57] : memref<1x128xf32, #tpu.memory_space<vmem>>, vector<1x128xf32>
      %cst_58 = arith.constant dense<0.000000e+00> : vector<128xf32>
      %123 = vector.multi_reduction <add>, %120, %cst_58 [0] : vector<8x128xf32> to vector<128xf32>
      %124 = vector.shape_cast %123 : vector<128xf32> to vector<1x128xf32>
      %cst_59 = arith.constant 8.000000e+00 : f32
      %125 = vector.broadcast %cst_59 : f32 to vector<1x128xf32>
      %126 = arith.divf %124, %125 : vector<1x128xf32>
      %127 = vector.broadcast %126 : vector<1x128xf32> to vector<8x128xf32>
      %128 = arith.subf %120, %127 : vector<8x128xf32>
      %129 = arith.mulf %128, %128 : vector<8x128xf32>
      %cst_60 = arith.constant dense<0.000000e+00> : vector<128xf32>
      %130 = vector.multi_reduction <add>, %129, %cst_60 [0] : vector<8x128xf32> to vector<128xf32>
      %131 = vector.shape_cast %130 : vector<128xf32> to vector<1x128xf32>
      %cst_61 = arith.constant 8.000000e+00 : f32
      %132 = vector.broadcast %cst_61 : f32 to vector<1x128xf32>
      %133 = arith.divf %131, %132 : vector<1x128xf32>
      %134 = vector.broadcast %126 : vector<1x128xf32> to vector<8x128xf32>
      %135 = arith.subf %120, %134 : vector<8x128xf32>
      %cst_62 = arith.constant 9.99999974E-6 : f32
      %136 = vector.broadcast %cst_62 : f32 to vector<1x128xf32>
      %137 = arith.addf %133, %136 : vector<1x128xf32>
      %138 = math.rsqrt %137 : vector<1x128xf32>
      %139 = vector.broadcast %138 : vector<1x128xf32> to vector<8x128xf32>
      %140 = arith.mulf %135, %139 : vector<8x128xf32>
      %141 = vector.broadcast %121 : vector<1x128xf32> to vector<8x128xf32>
      %142 = arith.mulf %140, %141 : vector<8x128xf32>
      %143 = vector.broadcast %122 : vector<1x128xf32> to vector<8x128xf32>
      %144 = arith.addf %142, %143 : vector<8x128xf32>
      %cst_63 = arith.constant 0.000000e+00 : f32
      %145 = vector.broadcast %cst_63 : f32 to vector<8x128xf32>
      %146 = arith.maximumf %144, %145 : vector<8x128xf32>
      %c0_64 = arith.constant 0 : index
      %c0_65 = arith.constant 0 : index
      %147 = vector.load %arg14[%c0_64, %c0_65] : memref<128x128xf32, #tpu.memory_space<vmem>>, vector<128x128xf32>
      %cst_66 = arith.constant dense<0.000000e+00> : vector<8x128xf32>
      %148 = tpu.matmul %146, %147, %cst_66 {dimension_numbers = #tpu.dot_dimension_numbers<[1], [0], [0], [1], [0, 0, 1, 1], [], []>} : vector<8x128xf32>, vector<128x128xf32>, vector<8x128xf32> -> vector<8x128xf32>
      %c0_67 = arith.constant 0 : index
      %c0_68 = arith.constant 0 : index
      %149 = vector.load %arg15[%c0_67, %c0_68] : memref<1x128xf32, #tpu.memory_space<vmem>>, vector<1x128xf32>
      %150 = vector.broadcast %149 : vector<1x128xf32> to vector<8x128xf32>
      %151 = arith.addf %148, %150 : vector<8x128xf32>
      %c0_69 = arith.constant 0 : index
      %c0_70 = arith.constant 0 : index
      %152 = vector.load %arg16[%c0_69, %c0_70] : memref<8x128xf32, #tpu.memory_space<vmem>>, vector<8x128xf32>
      tpu.vector_store %arg16[%c0_69, %c0_70], %151 {strides = array<i32>} : memref<8x128xf32, #tpu.memory_space<vmem>>, vector<8x128xf32>,
      %c0_71 = arith.constant 0 : index
      %c0_72 = arith.constant 0 : index
      %153 = vector.load %arg17[%c0_71, %c0_72] : memref<8x128xf32, #tpu.memory_space<vmem>>, vector<8x128xf32>
      tpu.vector_store %arg17[%c0_71, %c0_72], %118 {strides = array<i32>} : memref<8x128xf32, #tpu.memory_space<vmem>>, vector<8x128xf32>,
    } else {
    }
    return
  }
  func.func @transform_0(%arg0: i32) -> (i32, i32, i32) {
    %c0_i32 = arith.constant 0 : i32
    %c0_i32_0 = arith.constant 0 : i32
    %c0_i32_1 = arith.constant 0 : i32
    return %c0_i32, %c0_i32_0, %arg0 : i32, i32, i32
  }
  func.func @transform_1(%arg0: i32) -> (i32, i32, i32) {
    %c0_i32 = arith.constant 0 : i32
    %c0_i32_0 = arith.constant 0 : i32
    %c0_i32_1 = arith.constant 0 : i32
    %c0_i32_2 = arith.constant 0 : i32
    return %c0_i32, %c0_i32_0, %c0_i32_1 : i32, i32, i32
  }
  func.func @transform_2(%arg0: i32) -> (i32, i32) {
    %c0_i32 = arith.constant 0 : i32
    %c0_i32_0 = arith.constant 0 : i32
    %c0_i32_1 = arith.constant 0 : i32
    return %c0_i32, %c0_i32_0 : i32, i32
  }
  func.func @transform_3(%arg0: i32) -> (i32, i32) {
    %c0_i32 = arith.constant 0 : i32
    %c0_i32_0 = arith.constant 0 : i32
    %c0_i32_1 = arith.constant 0 : i32
    return %c0_i32, %c0_i32_0 : i32, i32
  }
  func.func @transform_4(%arg0: i32) -> (i32, i32) {
    %c0_i32 = arith.constant 0 : i32
    %c0_i32_0 = arith.constant 0 : i32
    %c0_i32_1 = arith.constant 0 : i32
    return %c0_i32, %c0_i32_0 : i32, i32
  }
  func.func @transform_5(%arg0: i32) -> (i32, i32) {
    %c0_i32 = arith.constant 0 : i32
    %c0_i32_0 = arith.constant 0 : i32
    %c0_i32_1 = arith.constant 0 : i32
    return %c0_i32, %c0_i32_0 : i32, i32
  }
  func.func @transform_6(%arg0: i32) -> (i32, i32) {
    %c0_i32 = arith.constant 0 : i32
    %c0_i32_0 = arith.constant 0 : i32
    %c0_i32_1 = arith.constant 0 : i32
    return %c0_i32, %c0_i32_0 : i32, i32
  }
  func.func @transform_7(%arg0: i32) -> (i32, i32) {
    %c0_i32 = arith.constant 0 : i32
    %c0_i32_0 = arith.constant 0 : i32
    %c0_i32_1 = arith.constant 0 : i32
    return %c0_i32, %c0_i32_0 : i32, i32
  }
  func.func @transform_8(%arg0: i32) -> (i32, i32) {
    %c0_i32 = arith.constant 0 : i32
    %c0_i32_0 = arith.constant 0 : i32
    %c0_i32_1 = arith.constant 0 : i32
    return %c0_i32, %c0_i32_0 : i32, i32
  }
  func.func @transform_9(%arg0: i32) -> (i32, i32) {
    %c0_i32 = arith.constant 0 : i32
    %c0_i32_0 = arith.constant 0 : i32
    %c0_i32_1 = arith.constant 0 : i32
    return %c0_i32, %c0_i32_0 : i32, i32
  }
  func.func @transform_10(%arg0: i32) -> (i32, i32) {
    %c0_i32 = arith.constant 0 : i32
    %c0_i32_0 = arith.constant 0 : i32
    %c0_i32_1 = arith.constant 0 : i32
    return %c0_i32, %c0_i32_0 : i32, i32
  }
  func.func @transform_11(%arg0: i32) -> (i32, i32) {
    %c0_i32 = arith.constant 0 : i32
    %c0_i32_0 = arith.constant 0 : i32
    %c0_i32_1 = arith.constant 0 : i32
    return %c0_i32, %c0_i32_0 : i32, i32
  }
  func.func @transform_12(%arg0: i32) -> (i32, i32) {
    %c0_i32 = arith.constant 0 : i32
    %c0_i32_0 = arith.constant 0 : i32
    %c0_i32_1 = arith.constant 0 : i32
    return %c0_i32, %c0_i32_0 : i32, i32
  }
  func.func @transform_13(%arg0: i32) -> (i32, i32) {
    %c0_i32 = arith.constant 0 : i32
    %c0_i32_0 = arith.constant 0 : i32
    %c0_i32_1 = arith.constant 0 : i32
    return %c0_i32, %c0_i32_0 : i32, i32
  }
  func.func @transform_14(%arg0: i32) -> (i32, i32) {
    %c0_i32 = arith.constant 0 : i32
    %c0_i32_0 = arith.constant 0 : i32
    %c0_i32_1 = arith.constant 0 : i32
    return %c0_i32, %c0_i32_0 : i32, i32
  }
  func.func @transform_15(%arg0: i32) -> (i32, i32) {
    %c0_i32 = arith.constant 0 : i32
    %c0_i32_0 = arith.constant 0 : i32
    %c0_i32_1 = arith.constant 0 : i32
    return %c0_i32, %c0_i32_0 : i32, i32
  }
  func.func @transform_16(%arg0: i32) -> (i32, i32) {
    %c0_i32 = arith.constant 0 : i32
    %c0_i32_0 = arith.constant 0 : i32
    %c0_i32_1 = arith.constant 0 : i32
    return %c0_i32, %c0_i32_0 : i32, i32
  }
}

</mosaic_0001>

<llo_original>
// kernel: simsiam_forward.1
$region0: #{simsiam_forward.1}
  #allocation0 [shape = 'u32[]', space=smem, size = 0x4, offset = 0x4, fixed_abs, tag = 'smem constant byte address 0x4 - core index']
  #allocation1 [shape = 'u32[72,128]{1,0:T(1,128)}', space=vmem, size = 0x9000, scoped, tag = 'internal scratch']
  #allocation2 [shape = 'f32[8,32]{1,0:T(8,128)}', space=vmem, size = 0x1000, scoped, tag = 'scratch operand']
  %s0 = inlined_call_operand.vmem [shape: f32[8,4,256], index: 0, kind: input, shape index: {}]
  %s1 = inlined_call_operand.vmem [shape: f32[4,32,1], index: 1, kind: input, shape index: {}]
  %s2 = inlined_call_operand.vmem [shape: f32[32,128], index: 2, kind: input, shape index: {}]
  %s3 = inlined_call_operand.vmem [shape: f32[1,128], index: 3, kind: input, shape index: {}]
  %s4 = inlined_call_operand.vmem [shape: f32[1,128], index: 4, kind: input, shape index: {}]
  %s5 = inlined_call_operand.vmem [shape: f32[128,128], index: 5, kind: input, shape index: {}]
  %s6 = inlined_call_operand.vmem [shape: f32[1,128], index: 6, kind: input, shape index: {}]
  %s7 = inlined_call_operand.vmem [shape: f32[1,128], index: 7, kind: input, shape index: {}]
  %s8 = inlined_call_operand.vmem [shape: f32[128,128], index: 8, kind: input, shape index: {}]
  %s9 = inlined_call_operand.vmem [shape: f32[1,128], index: 9, kind: input, shape index: {}]
  %s10 = inlined_call_operand.vmem [shape: f32[128,128], index: 10, kind: input, shape index: {}]
  %s11 = inlined_call_operand.vmem [shape: f32[1,128], index: 11, kind: input, shape index: {}]
  %s12 = inlined_call_operand.vmem [shape: f32[1,128], index: 12, kind: input, shape index: {}]
  %s13 = inlined_call_operand.vmem [shape: f32[128,128], index: 13, kind: input, shape index: {}]
  %s14 = inlined_call_operand.vmem [shape: f32[1,128], index: 14, kind: input, shape index: {}]
  %s15 = inlined_call_operand.hbm [shape: f32[8,128], index: 15, kind: output, shape index: {0}]
  %s16 = inlined_call_operand.hbm [shape: f32[8,128], index: 16, kind: output, shape index: {1}]
  %17 = xla_tuple %s15, %s16
  %s18 = sld [smem:[#allocation0]]
  $region150: #{simsiam_forward.1} parent=0
    _
  %s20 = ssub.s32 1, %s18
  %s21 = scalar_select 0, %s20, %s18
  $region1: #{simsiam_forward.1} parent=0
    #allocation3 [shape = 'u8[32768]{0}', space=vmem, size = 0x8000, scoped, tag = 'input window, operand 0']
    #allocation4 [shape = 'u8[4096]{0}', space=vmem, size = 0x1000, scoped, tag = 'output window, operand 0, single buffered']
    #allocation5 [shape = 's32[2]{0}', space=sflag, size = 0x8, scoped, tag = 'scoped memory for simsiam_forward.1']
    #allocation6 [shape = 'u8[4096]{0}', space=vmem, size = 0x1000, scoped, tag = 'output window, operand 1, single buffered']
    #allocation7 [shape = 's32[1]{0}', space=sflag, size = 0x4, scoped, tag = 'scoped memory for simsiam_forward.1']
    %22 = vsyncpa [#allocation5], 0
    %23 = vsyncpa [#allocation7], 0
    loop: start=0, step=1, limit=4
    $region2: #{simsiam_forward.1} parent=1 // loop_pre_header
      _
    $region3: #{simsiam_forward.1} parent=1 // loop_header
      %s25 = sphi 0, %s29
      %p26 = scmp.ge.s32.totalorder %s25, 4
      %s35 = sphi 0, %s37
      %s38 = sphi 0, %s35
      %s39 = sphi 0, %s38
      %s55 = sphi 0, %s39
      %s59 = sphi 0, %s59
      %s61 = sphi 0, %s59
      %s62 = sphi 0, %s61
      %s76 = sphi 0, %s62
      %s80 = sphi 0, %s80
      %s82 = sphi 0, %s80
      %s83 = sphi 0, %s82
      %s97 = sphi 0, %s83
      %s101 = sphi 0, %s101
      %s103 = sphi 0, %s101
      %s104 = sphi 0, %s103
      %s118 = sphi 0, %s104
      %s122 = sphi 0, %s122
      %s124 = sphi 0, %s122
      %s125 = sphi 0, %s124
      %s139 = sphi 0, %s125
      %s143 = sphi 0, %s143
      %s145 = sphi 0, %s143
      %s146 = sphi 0, %s145
      %s160 = sphi 0, %s146
      %s164 = sphi 0, %s164
      %s166 = sphi 0, %s164
      %s167 = sphi 0, %s166
      %s181 = sphi 0, %s167
      %s185 = sphi 0, %s185
      %s187 = sphi 0, %s185
      %s188 = sphi 0, %s187
      %s202 = sphi 0, %s188
      %s206 = sphi 0, %s206
      %s208 = sphi 0, %s206
      %s209 = sphi 0, %s208
      %s223 = sphi 0, %s209
      %s227 = sphi 0, %s227
      %s229 = sphi 0, %s227
      %s230 = sphi 0, %s229
      %s244 = sphi 0, %s230
      %s248 = sphi 0, %s248
      %s250 = sphi 0, %s248
      %s251 = sphi 0, %s250
      %s265 = sphi 0, %s251
      %s269 = sphi 0, %s269
      %s271 = sphi 0, %s269
      %s272 = sphi 0, %s271
      %s286 = sphi 0, %s272
      %s290 = sphi 0, %s290
      %s292 = sphi 0, %s290
      %s293 = sphi 0, %s292
      %s307 = sphi 0, %s293
      %s311 = sphi 0, %s311
      %s313 = sphi 0, %s311
      %s314 = sphi 0, %s313
      %s328 = sphi 0, %s314
      %s332 = sphi 0, %s332
      %s334 = sphi 0, %s332
      %s335 = sphi 0, %s334
      %s349 = sphi 0, %s335
      %s353 = sphi 0, %s353
      %s355 = sphi 0, %s353
      %s356 = sphi 0, %s355
      %s370 = sphi 0, %s356
      %s374 = sphi 0, %s374
      %s376 = sphi 0, %s374
      %s377 = sphi 0, %s376
      %s391 = sphi 0, %s377
    $region4: #{simsiam_forward.1} parent=1 // loop_header_branch
      %28 = sbr.rel (%p26) target = $region8
    $region5: #{simsiam_forward.1} parent=1 // loop_body
      %s30 = ssub.s32 %s25, 1
      %s31 = ssub.s32 %s25, 2
      %s32 = sadd.s32 %s25, 1
      %s33 = ssub.s32 %s25, %s32
      %p34 = scmp.eq.s32.totalorder %s33, 0
      %s36 = sadd.s32 %s35, 1
      %s37 = scalar_select %p34, %s35, %s36
      %p40 = pneg %p34
      %p41 = scmp.eq.s32.totalorder %s25, 1
      %p42 = por %p40, %p41
      %p43 = scmp.ne.s32.totalorder %s35, %s38
      %p44 = scmp.eq.s32.totalorder %s25, 0
      %p45 = por %p43, %p44
      %p46 = scmp.ne.s32.totalorder %s35, %s38
      %p47 = scmp.eq.s32.totalorder %s30, 1
      %p48 = por %p46, %p47
      %p49 = scmp.ne.s32.totalorder %s38, %s39
      %p50 = scmp.eq.s32.totalorder %s30, 0
      %p51 = por %p49, %p50
      %p52 = scmp.ne.s32.totalorder %s38, %s39
      %p53 = scmp.eq.s32.totalorder %s31, 1
      %p54 = por %p52, %p53
      %p56 = scmp.ne.s32.totalorder %s39, %s55
      %p57 = scmp.eq.s32.totalorder %s31, 0
      %p58 = por %p56, %p57
      %s60 = sadd.s32 %s59, 1
      %p63 = scmp.eq.s32.totalorder %s25, 1
      %p64 = scmp.ne.s32.totalorder %s59, %s61
      %p65 = scmp.eq.s32.totalorder %s25, 0
      %p66 = por %p64, %p65
      %p67 = scmp.ne.s32.totalorder %s59, %s61
      %p68 = scmp.eq.s32.totalorder %s30, 1
      %p69 = por %p67, %p68
      %p70 = scmp.ne.s32.totalorder %s61, %s62
      %p71 = scmp.eq.s32.totalorder %s30, 0
      %p72 = por %p70, %p71
      %p73 = scmp.ne.s32.totalorder %s61, %s62
      %p74 = scmp.eq.s32.totalorder %s31, 1
      %p75 = por %p73, %p74
      %p77 = scmp.ne.s32.totalorder %s62, %s76
      %p78 = scmp.eq.s32.totalorder %s31, 0
      %p79 = por %p77, %p78
      %s81 = sadd.s32 %s80, 1
      %p84 = scmp.eq.s32.totalorder %s25, 1
      %p85 = scmp.ne.s32.totalorder %s80, %s82
      %p86 = scmp.eq.s32.totalorder %s25, 0
      %p87 = por %p85, %p86
      %p88 = scmp.ne.s32.totalorder %s80, %s82
      %p89 = scmp.eq.s32.totalorder %s30, 1
      %p90 = por %p88, %p89
      %p91 = scmp.ne.s32.totalorder %s82, %s83
      %p92 = scmp.eq.s32.totalorder %s30, 0
      %p93 = por %p91, %p92
      %p94 = scmp.ne.s32.totalorder %s82, %s83
      %p95 = scmp.eq.s32.totalorder %s31, 1
      %p96 = por %p94, %p95
      %p98 = scmp.ne.s32.totalorder %s83, %s97
      %p99 = scmp.eq.s32.totalorder %s31, 0
      %p100 = por %p98, %p99
      %s102 = sadd.s32 %s101, 1
      %p105 = scmp.eq.s32.totalorder %s25, 1
      %p106 = scmp.ne.s32.totalorder %s101, %s103
      %p107 = scmp.eq.s32.totalorder %s25, 0
      %p108 = por %p106, %p107
      %p109 = scmp.ne.s32.totalorder %s101, %s103
      %p110 = scmp.eq.s32.totalorder %s30, 1
      %p111 = por %p109, %p110
      %p112 = scmp.ne.s32.totalorder %s103, %s104
      %p113 = scmp.eq.s32.totalorder %s30, 0
      %p114 = por %p112, %p113
      %p115 = scmp.ne.s32.totalorder %s103, %s104
      %p116 = scmp.eq.s32.totalorder %s31, 1
      %p117 = por %p115, %p116
      %p119 = scmp.ne.s32.totalorder %s104, %s118
      %p120 = scmp.eq.s32.totalorder %s31, 0
      %p121 = por %p119, %p120
      %s123 = sadd.s32 %s122, 1
      %p126 = scmp.eq.s32.totalorder %s25, 1
      %p127 = scmp.ne.s32.totalorder %s122, %s124
      %p128 = scmp.eq.s32.totalorder %s25, 0
      %p129 = por %p127, %p128
      %p130 = scmp.ne.s32.totalorder %s122, %s124
      %p131 = scmp.eq.s32.totalorder %s30, 1
      %p132 = por %p130, %p131
      %p133 = scmp.ne.s32.totalorder %s124, %s125
      %p134 = scmp.eq.s32.totalorder %s30, 0
      %p135 = por %p133, %p134
      %p136 = scmp.ne.s32.totalorder %s124, %s125
      %p137 = scmp.eq.s32.totalorder %s31, 1
      %p138 = por %p136, %p137
      %p140 = scmp.ne.s32.totalorder %s125, %s139
      %p141 = scmp.eq.s32.totalorder %s31, 0
      %p142 = por %p140, %p141
      %s144 = sadd.s32 %s143, 1
      %p147 = scmp.eq.s32.totalorder %s25, 1
      %p148 = scmp.ne.s32.totalorder %s143, %s145
      %p149 = scmp.eq.s32.totalorder %s25, 0
      %p150 = por %p148, %p149
      %p151 = scmp.ne.s32.totalorder %s143, %s145
      %p152 = scmp.eq.s32.totalorder %s30, 1
      %p153 = por %p151, %p152
      %p154 = scmp.ne.s32.totalorder %s145, %s146
      %p155 = scmp.eq.s32.totalorder %s30, 0
      %p156 = por %p154, %p155
      %p157 = scmp.ne.s32.totalorder %s145, %s146
      %p158 = scmp.eq.s32.totalorder %s31, 1
      %p159 = por %p157, %p158
      %p161 = scmp.ne.s32.totalorder %s146, %s160
      %p162 = scmp.eq.s32.totalorder %s31, 0
      %p163 = por %p161, %p162
      %s165 = sadd.s32 %s164, 1
      %p168 = scmp.eq.s32.totalorder %s25, 1
      %p169 = scmp.ne.s32.totalorder %s164, %s166
      %p170 = scmp.eq.s32.totalorder %s25, 0
      %p171 = por %p169, %p170
      %p172 = scmp.ne.s32.totalorder %s164, %s166
      %p173 = scmp.eq.s32.totalorder %s30, 1
      %p174 = por %p172, %p173
      %p175 = scmp.ne.s32.totalorder %s166, %s167
      %p176 = scmp.eq.s32.totalorder %s30, 0
      %p177 = por %p175, %p176
      %p178 = scmp.ne.s32.totalorder %s166, %s167
      %p179 = scmp.eq.s32.totalorder %s31, 1
      %p180 = por %p178, %p179
      %p182 = scmp.ne.s32.totalorder %s167, %s181
      %p183 = scmp.eq.s32.totalorder %s31, 0
      %p184 = por %p182, %p183
      %s186 = sadd.s32 %s185, 1
      %p189 = scmp.eq.s32.totalorder %s25, 1
      %p190 = scmp.ne.s32.totalorder %s185, %s187
      %p191 = scmp.eq.s32.totalorder %s25, 0
      %p192 = por %p190, %p191
      %p193 = scmp.ne.s32.totalorder %s185, %s187
      %p194 = scmp.eq.s32.totalorder %s30, 1
      %p195 = por %p193, %p194
      %p196 = scmp.ne.s32.totalorder %s187, %s188
      %p197 = scmp.eq.s32.totalorder %s30, 0
      %p198 = por %p196, %p197
      %p199 = scmp.ne.s32.totalorder %s187, %s188
      %p200 = scmp.eq.s32.totalorder %s31, 1
      %p201 = por %p199, %p200
      %p203 = scmp.ne.s32.totalorder %s188, %s202
      %p204 = scmp.eq.s32.totalorder %s31, 0
      %p205 = por %p203, %p204
      %s207 = sadd.s32 %s206, 1
      %p210 = scmp.eq.s32.totalorder %s25, 1
      %p211 = scmp.ne.s32.totalorder %s206, %s208
      %p212 = scmp.eq.s32.totalorder %s25, 0
      %p213 = por %p211, %p212
      %p214 = scmp.ne.s32.totalorder %s206, %s208
      %p215 = scmp.eq.s32.totalorder %s30, 1
      %p216 = por %p214, %p215
      %p217 = scmp.ne.s32.totalorder %s208, %s209
      %p218 = scmp.eq.s32.totalorder %s30, 0
      %p219 = por %p217, %p218
      %p220 = scmp.ne.s32.totalorder %s208, %s209
      %p221 = scmp.eq.s32.totalorder %s31, 1
      %p222 = por %p220, %p221
      %p224 = scmp.ne.s32.totalorder %s209, %s223
      %p225 = scmp.eq.s32.totalorder %s31, 0
      %p226 = por %p224, %p225
      %s228 = sadd.s32 %s227, 1
      %p231 = scmp.eq.s32.totalorder %s25, 1
      %p232 = scmp.ne.s32.totalorder %s227, %s229
      %p233 = scmp.eq.s32.totalorder %s25, 0
      %p234 = por %p232, %p233
      %p235 = scmp.ne.s32.totalorder %s227, %s229
      %p236 = scmp.eq.s32.totalorder %s30, 1
      %p237 = por %p235, %p236
      %p238 = scmp.ne.s32.totalorder %s229, %s230
      %p239 = scmp.eq.s32.totalorder %s30, 0
      %p240 = por %p238, %p239
      %p241 = scmp.ne.s32.totalorder %s229, %s230
      %p242 = scmp.eq.s32.totalorder %s31, 1
      %p243 = por %p241, %p242
      %p245 = scmp.ne.s32.totalorder %s230, %s244
      %p246 = scmp.eq.s32.totalorder %s31, 0
      %p247 = por %p245, %p246
      %s249 = sadd.s32 %s248, 1
      %p252 = scmp.eq.s32.totalorder %s25, 1
      %p253 = scmp.ne.s32.totalorder %s248, %s250
      %p254 = scmp.eq.s32.totalorder %s25, 0
      %p255 = por %p253, %p254
      %p256 = scmp.ne.s32.totalorder %s248, %s250
      %p257 = scmp.eq.s32.totalorder %s30, 1
      %p258 = por %p256, %p257
      %p259 = scmp.ne.s32.totalorder %s250, %s251
      %p260 = scmp.eq.s32.totalorder %s30, 0
      %p261 = por %p259, %p260
      %p262 = scmp.ne.s32.totalorder %s250, %s251
      %p263 = scmp.eq.s32.totalorder %s31, 1
      %p264 = por %p262, %p263
      %p266 = scmp.ne.s32.totalorder %s251, %s265
      %p267 = scmp.eq.s32.totalorder %s31, 0
      %p268 = por %p266, %p267
      %s270 = sadd.s32 %s269, 1
      %p273 = scmp.eq.s32.totalorder %s25, 1
      %p274 = scmp.ne.s32.totalorder %s269, %s271
      %p275 = scmp.eq.s32.totalorder %s25, 0
      %p276 = por %p274, %p275
      %p277 = scmp.ne.s32.totalorder %s269, %s271
      %p278 = scmp.eq.s32.totalorder %s30, 1
      %p279 = por %p277, %p278
      %p280 = scmp.ne.s32.totalorder %s271, %s272
      %p281 = scmp.eq.s32.totalorder %s30, 0
      %p282 = por %p280, %p281
      %p283 = scmp.ne.s32.totalorder %s271, %s272
      %p284 = scmp.eq.s32.totalorder %s31, 1
      %p285 = por %p283, %p284
      %p287 = scmp.ne.s32.totalorder %s272, %s286
      %p288 = scmp.eq.s32.totalorder %s31, 0
      %p289 = por %p287, %p288
      %s291 = sadd.s32 %s290, 1
      %p294 = scmp.eq.s32.totalorder %s25, 1
      %p295 = scmp.ne.s32.totalorder %s290, %s292
      %p296 = scmp.eq.s32.totalorder %s25, 0
      %p297 = por %p295, %p296
      %p298 = scmp.ne.s32.totalorder %s290, %s292
      %p299 = scmp.eq.s32.totalorder %s30, 1
      %p300 = por %p298, %p299
      %p301 = scmp.ne.s32.totalorder %s292, %s293
      %p302 = scmp.eq.s32.totalorder %s30, 0
      %p303 = por %p301, %p302
      %p304 = scmp.ne.s32.totalorder %s292, %s293
      %p305 = scmp.eq.s32.totalorder %s31, 1
      %p306 = por %p304, %p305
      %p308 = scmp.ne.s32.totalorder %s293, %s307
      %p309 = scmp.eq.s32.totalorder %s31, 0
      %p310 = por %p308, %p309
      %s312 = sadd.s32 %s311, 1
      %p315 = scmp.eq.s32.totalorder %s25, 1
      %p316 = scmp.ne.s32.totalorder %s311, %s313
      %p317 = scmp.eq.s32.totalorder %s25, 0
      %p318 = por %p316, %p317
      %p319 = scmp.ne.s32.totalorder %s311, %s313
      %p320 = scmp.eq.s32.totalorder %s30, 1
      %p321 = por %p319, %p320
      %p322 = scmp.ne.s32.totalorder %s313, %s314
      %p323 = scmp.eq.s32.totalorder %s30, 0
      %p324 = por %p322, %p323
      %p325 = scmp.ne.s32.totalorder %s313, %s314
      %p326 = scmp.eq.s32.totalorder %s31, 1
      %p327 = por %p325, %p326
      %p329 = scmp.ne.s32.totalorder %s314, %s328
      %p330 = scmp.eq.s32.totalorder %s31, 0
      %p331 = por %p329, %p330
      %s333 = sadd.s32 %s332, 1
      %p336 = scmp.eq.s32.totalorder %s25, 1
      %p337 = scmp.ne.s32.totalorder %s332, %s334
      %p338 = scmp.eq.s32.totalorder %s25, 0
      %p339 = por %p337, %p338
      %p340 = scmp.ne.s32.totalorder %s332, %s334
      %p341 = scmp.eq.s32.totalorder %s30, 1
      %p342 = por %p340, %p341
      %p343 = scmp.ne.s32.totalorder %s334, %s335
      %p344 = scmp.eq.s32.totalorder %s30, 0
      %p345 = por %p343, %p344
      %p346 = scmp.ne.s32.totalorder %s334, %s335
      %p347 = scmp.eq.s32.totalorder %s31, 1
      %p348 = por %p346, %p347
      %p350 = scmp.ne.s32.totalorder %s335, %s349
      %p351 = scmp.eq.s32.totalorder %s31, 0
      %p352 = por %p350, %p351
      %s354 = sadd.s32 %s353, 1
      %p357 = scmp.eq.s32.totalorder %s25, 1
      %p358 = scmp.ne.s32.totalorder %s353, %s355
      %p359 = scmp.eq.s32.totalorder %s25, 0
      %p360 = por %p358, %p359
      %p361 = scmp.ne.s32.totalorder %s353, %s355
      %p362 = scmp.eq.s32.totalorder %s30, 1
      %p363 = por %p361, %p362
      %p364 = scmp.ne.s32.totalorder %s355, %s356
      %p365 = scmp.eq.s32.totalorder %s30, 0
      %p366 = por %p364, %p365
      %p367 = scmp.ne.s32.totalorder %s355, %s356
      %p368 = scmp.eq.s32.totalorder %s31, 1
      %p369 = por %p367, %p368
      %p371 = scmp.ne.s32.totalorder %s356, %s370
      %p372 = scmp.eq.s32.totalorder %s31, 0
      %p373 = por %p371, %p372
      %s375 = sadd.s32 %s374, 1
      %p378 = scmp.eq.s32.totalorder %s25, 1
      %p379 = scmp.ne.s32.totalorder %s374, %s376
      %p380 = scmp.eq.s32.totalorder %s25, 0
      %p381 = por %p379, %p380
      %p382 = scmp.ne.s32.totalorder %s374, %s376
      %p383 = scmp.eq.s32.totalorder %s30, 1
      %p384 = por %p382, %p383
      %p385 = scmp.ne.s32.totalorder %s376, %s377
      %p386 = scmp.eq.s32.totalorder %s30, 0
      %p387 = por %p385, %p386
      %p388 = scmp.ne.s32.totalorder %s376, %s377
      %p389 = scmp.eq.s32.totalorder %s31, 1
      %p390 = por %p388, %p389
      %p392 = scmp.ne.s32.totalorder %s377, %s391
      %p393 = scmp.eq.s32.totalorder %s31, 0
      %p394 = por %p392, %p393
      %p395 = scmp.le.s32.totalorder 1, %s25
      %p396 = scmp.lt.s32.totalorder %s25, 3
      %p397 = pnand %p395, %p396
      %p398 = pneg %p397
      // Predicated region
      $region9: #{simsiam_forward.1} parent=5 // pred_check
        _
      $region10: #{simsiam_forward.1} parent=5 // pred_check_branch
        %400 = sbr.rel (%p397) target = $region12
      $region11: #{simsiam_forward.1} parent=5 // pred_region
        %s401 = ssub.s32 %s25, 1
        // Predicated region
        $region13: #{simsiam_forward.1} parent=11 // pred_check
          %p402 = pneg %p72
        $region14: #{simsiam_forward.1} parent=11 // pred_check_branch
          %404 = sbr.rel (%p402) target = $region16
        $region15: #{simsiam_forward.1} parent=11 // pred_region
          _
        $region16: #{simsiam_forward.1} parent=11 // pred_fallthru
          _
        // Predicated region
        $region17: #{simsiam_forward.1} parent=11 // pred_check
          %p405 = pneg %p93
        $region18: #{simsiam_forward.1} parent=11 // pred_check_branch
          %407 = sbr.rel (%p405) target = $region20
        $region19: #{simsiam_forward.1} parent=11 // pred_region
          _
        $region20: #{simsiam_forward.1} parent=11 // pred_fallthru
          _
        // Predicated region
        $region21: #{simsiam_forward.1} parent=11 // pred_check
          %p408 = pneg %p114
        $region22: #{simsiam_forward.1} parent=11 // pred_check_branch
          %410 = sbr.rel (%p408) target = $region24
        $region23: #{simsiam_forward.1} parent=11 // pred_region
          _
        $region24: #{simsiam_forward.1} parent=11 // pred_fallthru
          _
        // Predicated region
        $region25: #{simsiam_forward.1} parent=11 // pred_check
          %p411 = pneg %p135
        $region26: #{simsiam_forward.1} parent=11 // pred_check_branch
          %413 = sbr.rel (%p411) target = $region28
        $region27: #{simsiam_forward.1} parent=11 // pred_region
          _
        $region28: #{simsiam_forward.1} parent=11 // pred_fallthru
          _
        // Predicated region
        $region29: #{simsiam_forward.1} parent=11 // pred_check
          %p414 = pneg %p156
        $region30: #{simsiam_forward.1} parent=11 // pred_check_branch
          %416 = sbr.rel (%p414) target = $region32
        $region31: #{simsiam_forward.1} parent=11 // pred_region
          _
        $region32: #{simsiam_forward.1} parent=11 // pred_fallthru
          _
        // Predicated region
        $region33: #{simsiam_forward.1} parent=11 // pred_check
          %p417 = pneg %p177
        $region34: #{simsiam_forward.1} parent=11 // pred_check_branch
          %419 = sbr.rel (%p417) target = $region36
        $region35: #{simsiam_forward.1} parent=11 // pred_region
          _
        $region36: #{simsiam_forward.1} parent=11 // pred_fallthru
          _
        // Predicated region
        $region37: #{simsiam_forward.1} parent=11 // pred_check
          %p420 = pneg %p198
        $region38: #{simsiam_forward.1} parent=11 // pred_check_branch
          %422 = sbr.rel (%p420) target = $region40
        $region39: #{simsiam_forward.1} parent=11 // pred_region
          _
        $region40: #{simsiam_forward.1} parent=11 // pred_fallthru
          _
        // Predicated region
        $region41: #{simsiam_forward.1} parent=11 // pred_check
          %p423 = pneg %p219
        $region42: #{simsiam_forward.1} parent=11 // pred_check_branch
          %425 = sbr.rel (%p423) target = $region44
        $region43: #{simsiam_forward.1} parent=11 // pred_region
          _
        $region44: #{simsiam_forward.1} parent=11 // pred_fallthru
          _
        // Predicated region
        $region45: #{simsiam_forward.1} parent=11 // pred_check
          %p426 = pneg %p240
        $region46: #{simsiam_forward.1} parent=11 // pred_check_branch
          %428 = sbr.rel (%p426) target = $region48
        $region47: #{simsiam_forward.1} parent=11 // pred_region
          _
        $region48: #{simsiam_forward.1} parent=11 // pred_fallthru
          _
        // Predicated region
        $region49: #{simsiam_forward.1} parent=11 // pred_check
          %p429 = pneg %p261
        $region50: #{simsiam_forward.1} parent=11 // pred_check_branch
          %431 = sbr.rel (%p429) target = $region52
        $region51: #{simsiam_forward.1} parent=11 // pred_region
          _
        $region52: #{simsiam_forward.1} parent=11 // pred_fallthru
          _
        // Predicated region
        $region53: #{simsiam_forward.1} parent=11 // pred_check
          %p432 = pneg %p282
        $region54: #{simsiam_forward.1} parent=11 // pred_check_branch
          %434 = sbr.rel (%p432) target = $region56
        $region55: #{simsiam_forward.1} parent=11 // pred_region
          _
        $region56: #{simsiam_forward.1} parent=11 // pred_fallthru
          _
        // Predicated region
        $region57: #{simsiam_forward.1} parent=11 // pred_check
          %p435 = pneg %p303
        $region58: #{simsiam_forward.1} parent=11 // pred_check_branch
          %437 = sbr.rel (%p435) target = $region60
        $region59: #{simsiam_forward.1} parent=11 // pred_region
          _
        $region60: #{simsiam_forward.1} parent=11 // pred_fallthru
          _
        // Predicated region
        $region61: #{simsiam_forward.1} parent=11 // pred_check
          %p438 = pneg %p324
        $region62: #{simsiam_forward.1} parent=11 // pred_check_branch
          %440 = sbr.rel (%p438) target = $region64
        $region63: #{simsiam_forward.1} parent=11 // pred_region
          _
        $region64: #{simsiam_forward.1} parent=11 // pred_fallthru
          _
        // Predicated region
        $region65: #{simsiam_forward.1} parent=11 // pred_check
          %p441 = pneg %p345
        $region66: #{simsiam_forward.1} parent=11 // pred_check_branch
          %443 = sbr.rel (%p441) target = $region68
        $region67: #{simsiam_forward.1} parent=11 // pred_region
          _
        $region68: #{simsiam_forward.1} parent=11 // pred_fallthru
          _
      $region12: #{simsiam_forward.1} parent=5 // pred_fallthru
        _
      %p444 = scmp.lt.s32.totalorder %s25, 2
      // Predicated region
      $region69: #{simsiam_forward.1} parent=5 // pred_check
        %p445 = pneg %p444
      $region70: #{simsiam_forward.1} parent=5 // pred_check_branch
        %447 = sbr.rel (%p445) target = $region72
      $region71: #{simsiam_forward.1} parent=5 // pred_region
        // Predicated region
        $region73: #{simsiam_forward.1} parent=71 // pred_check
          %p448 = pneg %p45
        $region74: #{simsiam_forward.1} parent=71 // pred_check_branch
          %450 = sbr.rel (%p448) target = $region76
        $region75: #{simsiam_forward.1} parent=71 // pred_region
          %s451 = sand.u32 %s35, 1
          %s452 = sand.u32 %s35, 1
          %s453 = smul.addr %s452, 32
          %s454 = scalar_lea.vmem [#allocation3], %s453
          %s455 = smul.addr %s25, 4
          %s456 = scalar_lea.vmem %s0, %s455
          // Predicated region
          $region77: #{simsiam_forward.1} parent=75 // pred_check
            _
          $region78: #{simsiam_forward.1} parent=75 // pred_check_branch
            %458 = sbr.rel (0) target = $region80
          $region79: #{simsiam_forward.1} parent=75 // pred_region
            // Predicated region
            $region81: #{simsiam_forward.1} parent=79 // pred_check
              _
            $region82: #{simsiam_forward.1} parent=79 // pred_check_branch
              %460 = sbr.rel target = $region84
            $region83: #{simsiam_forward.1} parent=79 // pred_region
              // Predicated region
              $region96: #{simsiam_forward.1} parent=83 // pred_check
                _
              $region97: #{simsiam_forward.1} parent=83 // pred_check_branch
                %490 = sbr.rel (0) target = $region99
              $region98: #{simsiam_forward.1} parent=83 // pred_region
                loop: start=0, step=1, limit=1
                $region100: #{simsiam_forward.1} parent=98 // loop_pre_header
                  _
                $region101: #{simsiam_forward.1} parent=98 // loop_header
                  %s492 = sphi 0, %s496
                  %p493 = scmp.ge.s32.totalorder %s492, 1
                  %s497 = sphi %s456, %s456
                  %s498 = sphi %s454, %s454
                $region102: #{simsiam_forward.1} parent=98 // loop_header_branch
                  %495 = sbr.rel (%p493) target = $region106
                $region103: #{simsiam_forward.1} parent=98 // loop_body
                  _
                $region104: #{simsiam_forward.1} parent=98 // loop_footer
                  %s496 = sadd.s32 1, %s492
                $region105: #{simsiam_forward.1} parent=98 // loop_footer_branch
                  %491 = sbr.rel target = $region101
                $region106: #{simsiam_forward.1} parent=98 // loop_exit
                  _
                %s500 = ssub.s32 16, 1
                loop: start=0, step=1, limit=1
                $region107: #{simsiam_forward.1} parent=98 // loop_pre_header
                  _
                $region108: #{simsiam_forward.1} parent=98 // loop_header
                  %s502 = sphi 0, %s506
                  %p503 = scmp.ge.s32.totalorder %s502, 1
                  %s507 = sphi %s456, %s456
                  %s508 = sphi %s454, %s454
                $region109: #{simsiam_forward.1} parent=98 // loop_header_branch
                  %505 = sbr.rel (%p503) target = $region113
                $region110: #{simsiam_forward.1} parent=98 // loop_body
                  %v509 = vld [vmem:[%s507] sm:%s500]
                  %510 = vst [vmem:[%s508] sm:%s500] %v509
                  %v511 = vld [vmem:[%s507 + $0x8] sm:%s500]
                  %512 = vst [vmem:[%s508 + $0x4] sm:%s500] %v511
                  %v513 = vld [vmem:[%s507 + $0x10] sm:%s500]
                  %514 = vst [vmem:[%s508 + $0x8] sm:%s500] %v513
                  %v515 = vld [vmem:[%s507 + $0x18] sm:%s500]
                  %516 = vst [vmem:[%s508 + $0xc] sm:%s500] %v515
                  %v517 = vld [vmem:[%s507 + $0x20] sm:%s500]
                  %518 = vst [vmem:[%s508 + $0x10] sm:%s500] %v517
                  %v519 = vld [vmem:[%s507 + $0x28] sm:%s500]
                  %520 = vst [vmem:[%s508 + $0x14] sm:%s500] %v519
                  %v521 = vld [vmem:[%s507 + $0x30] sm:%s500]
                  %522 = vst [vmem:[%s508 + $0x18] sm:%s500] %v521
                  %v523 = vld [vmem:[%s507 + $0x38] sm:%s500]
                  %524 = vst [vmem:[%s508 + $0x1c] sm:%s500] %v523
                $region111: #{simsiam_forward.1} parent=98 // loop_footer
                  %s506 = sadd.s32 1, %s502
                $region112: #{simsiam_forward.1} parent=98 // loop_footer_branch
                  %501 = sbr.rel target = $region108
                $region113: #{simsiam_forward.1} parent=98 // loop_exit
                  _
              $region99: #{simsiam_forward.1} parent=83 // pred_fallthru
                _
            $region84: #{simsiam_forward.1} parent=79 // pred_fallthru
              _
            // Predicated region
            $region85: #{simsiam_forward.1} parent=79 // pred_check
              _
            $region86: #{simsiam_forward.1} parent=79 // pred_check_branch
              %462 = sbr.rel (0) target = $region88
            $region87: #{simsiam_forward.1} parent=79 // pred_region
              %s464 = ssub.s32 16, 1
              loop: start=0, step=1, limit=1
              $region89: #{simsiam_forward.1} parent=87 // loop_pre_header
                _
              $region90: #{simsiam_forward.1} parent=87 // loop_header
                %s466 = sphi 0, %s470
                %p467 = scmp.ge.s32.totalorder %s466, 1
                %s471 = sphi %s456, %s456
                %s472 = sphi %s454, %s454
              $region91: #{simsiam_forward.1} parent=87 // loop_header_branch
                %469 = sbr.rel (%p467) target = $region95
              $region92: #{simsiam_forward.1} parent=87 // loop_body
                %v473 = vld [vmem:[%s471] sm:%s464]
                %474 = vst [vmem:[%s472] sm:%s464] %v473
                %v475 = vld [vmem:[%s471 + $0x8] sm:%s464]
                %476 = vst [vmem:[%s472 + $0x4] sm:%s464] %v475
                %v477 = vld [vmem:[%s471 + $0x10] sm:%s464]
                %478 = vst [vmem:[%s472 + $0x8] sm:%s464] %v477
                %v479 = vld [vmem:[%s471 + $0x18] sm:%s464]
                %480 = vst [vmem:[%s472 + $0xc] sm:%s464] %v479
                %v481 = vld [vmem:[%s471 + $0x20] sm:%s464]
                %482 = vst [vmem:[%s472 + $0x10] sm:%s464] %v481
                %v483 = vld [vmem:[%s471 + $0x28] sm:%s464]
                %484 = vst [vmem:[%s472 + $0x14] sm:%s464] %v483
                %v485 = vld [vmem:[%s471 + $0x30] sm:%s464]
                %486 = vst [vmem:[%s472 + $0x18] sm:%s464] %v485
                %v487 = vld [vmem:[%s471 + $0x38] sm:%s464]
                %488 = vst [vmem:[%s472 + $0x1c] sm:%s464] %v487
              $region93: #{simsiam_forward.1} parent=87 // loop_footer
                %s470 = sadd.s32 1, %s466
              $region94: #{simsiam_forward.1} parent=87 // loop_footer_branch
                %465 = sbr.rel target = $region90
              $region95: #{simsiam_forward.1} parent=87 // loop_exit
                _
            $region88: #{simsiam_forward.1} parent=79 // pred_fallthru
              _
          $region80: #{simsiam_forward.1} parent=75 // pred_fallthru
            _
          %525 = vnop
        $region76: #{simsiam_forward.1} parent=71 // pred_fallthru
          _
      $region72: #{simsiam_forward.1} parent=5 // pred_fallthru
        _
      %p526 = scmp.le.s32.totalorder 1, %s25
      %p527 = scmp.lt.s32.totalorder %s25, 3
      %p528 = pnand %p526, %p527
      %p529 = pneg %p528
      // Predicated region
      $region114: #{simsiam_forward.1} parent=5 // pred_check
        _
      $region115: #{simsiam_forward.1} parent=5 // pred_check_branch
        %531 = sbr.rel (%p528) target = $region117
      $region116: #{simsiam_forward.1} parent=5 // pred_region
        %s532 = ssub.s32 %s25, 1
        %s533 = sand.u32 %s38, 1
        %s534 = sand.u32 %s38, 1
        %s535 = smul.addr %s534, 32
        %s536 = scalar_lea.vmem [#allocation3], %s535
        // Predicated region
        $region118: #{simsiam_forward.1} parent=116 // pred_check
          %p537 = pneg %p51
        $region119: #{simsiam_forward.1} parent=116 // pred_check_branch
          %539 = sbr.rel (%p537) target = $region121
        $region120: #{simsiam_forward.1} parent=116 // pred_region
          _
        $region121: #{simsiam_forward.1} parent=116 // pred_fallthru
          _
        %s540 = sand.u32 %s38, 1
        %s541 = sand.u32 %s38, 1
        %s542 = smul.addr %s541, 32
        %s543 = scalar_lea.vmem [#allocation3], %s542
        %p544 = pneg %p51
        %p545 = pneg %p48
        %p546 = pneg %p72
        %p547 = pneg %p69
        %p548 = pneg %p93
        %p549 = pneg %p90
        %p550 = pneg %p114
        %p551 = pneg %p111
        %p552 = pneg %p135
        %p553 = pneg %p132
        %p554 = pneg %p156
        %p555 = pneg %p153
        %p556 = pneg %p177
        %p557 = pneg %p174
        %p558 = pneg %p198
        %p559 = pneg %p195
        %p560 = pneg %p219
        %p561 = pneg %p216
        %p562 = pneg %p240
        %p563 = pneg %p237
        %p564 = pneg %p261
        %p565 = pneg %p258
        %p566 = pneg %p282
        %p567 = pneg %p279
        %p568 = pneg %p303
        %p569 = pneg %p300
        %p570 = pneg %p324
        %p571 = pneg %p321
        %p572 = pneg %p345
        %p573 = pneg %p342
        %p574 = pneg %p366
        %p575 = pneg %p363
        %p576 = pneg %p387
        %p577 = pneg %p384
        %p578 = scmp.eq.s32.totalorder %s30, 0
        // Predicated region
        $region122: #{simsiam_forward.1} parent=116 // pred_check
          %p579 = pneg %p578
        $region123: #{simsiam_forward.1} parent=116 // pred_check_branch
          %581 = sbr.rel (%p579) target = $region125
        $region124: #{simsiam_forward.1} parent=116 // pred_region
          %vm582 = vcmask 261120
          %583 = vst.msk [vmem:[#allocation2] sm:$0xff] %vm582, 0.0
        $region125: #{simsiam_forward.1} parent=116 // pred_fallthru
          _
        %v584 = vld [vmem:[%s536] sm:$0xf]
        %v585 = vld [vmem:[%s536 + $0x4] sm:$0xf]
        %v586 = vld [vmem:[%s536 + $0x8] sm:$0xf]
        %v587 = vld [vmem:[%s536 + $0xc] sm:$0xf]
        %v588 = vld [vmem:[%s536 + $0x10] sm:$0xf]
        %v589 = vld [vmem:[%s536 + $0x14] sm:$0xf]
        %v590 = vld [vmem:[%s536 + $0x18] sm:$0xf]
        %v591 = vld [vmem:[%s536 + $0x1c] sm:$0xf]
        %v592 = vld [vmem:[%s1] sm:$0xff]
        %v593 = vld [vmem:[%s1 + $0x8] sm:$0xff]
        %v594 = vld [vmem:[%s1 + $0x10] sm:$0xff]
        %v595 = vld [vmem:[%s1 + $0x18] sm:$0xff]
        %v596 = vld [vmem:[%s1 + $0x20] sm:$0xff]
        %v597 = vld [vmem:[%s1 + $0x28] sm:$0xff]
        %v598 = vld [vmem:[%s1 + $0x30] sm:$0xff]
        %v599 = vld [vmem:[%s1 + $0x38] sm:$0xff]
        %v600 = vld [vmem:[%s1 + $0x40] sm:$0xff]
        %v601 = vld [vmem:[%s1 + $0x48] sm:$0xff]
        %v602 = vld [vmem:[%s1 + $0x50] sm:$0xff]
        %v603 = vld [vmem:[%s1 + $0x58] sm:$0xff]
        %v604 = vld [vmem:[%s1 + $0x60] sm:$0xff]
        %v605 = vld [vmem:[%s1 + $0x68] sm:$0xff]
        %v606 = vld [vmem:[%s1 + $0x70] sm:$0xff]
        %v607 = vld [vmem:[%s1 + $0x78] sm:$0xff]
        %v608 = vperm.slane %v584, 0
        %v609 = vperm.slane %v585, 0
        %v610 = vperm.slane %v586, 0
        %v611 = vperm.slane %v587, 0
        %v612 = vperm.slane %v588, 0
        %v613 = vperm.slane %v589, 0
        %v614 = vperm.slane %v590, 0
        %v615 = vperm.slane %v591, 0
        %617 = vset.pattern.permute.xlu0 0
        %618 = vperm.xlu0 %617, %v592
        %v619 = vpop.permute.xlu0 %618
        %622 = vset.pattern.permute.xlu0 0
        %623 = vperm.xlu0 %622, %v593
        %v624 = vpop.permute.xlu0 %623
        %627 = vset.pattern.permute.xlu0 0
        %628 = vperm.xlu0 %627, %v594
        %v629 = vpop.permute.xlu0 %628
        %632 = vset.pattern.permute.xlu0 0
        %633 = vperm.xlu0 %632, %v595
        %v634 = vpop.permute.xlu0 %633
        %v636 = vmul.f32 %v608, %v619
        %v637 = vmul.f32 %v608, %v624
        %v638 = vmul.f32 %v608, %v629
        %v639 = vmul.f32 %v608, %v634
        %v640 = vmul.f32 %v609, %v619
        %v641 = vmul.f32 %v609, %v624
        %v642 = vmul.f32 %v609, %v629
        %v643 = vmul.f32 %v609, %v634
        %v644 = vmul.f32 %v610, %v619
        %v645 = vmul.f32 %v610, %v624
        %v646 = vmul.f32 %v610, %v629
        %v647 = vmul.f32 %v610, %v634
        %v648 = vmul.f32 %v611, %v619
        %v649 = vmul.f32 %v611, %v624
        %v650 = vmul.f32 %v611, %v629
        %v651 = vmul.f32 %v611, %v634
        %v652 = vmul.f32 %v612, %v619
        %v653 = vmul.f32 %v612, %v624
        %v654 = vmul.f32 %v612, %v629
        %v655 = vmul.f32 %v612, %v634
        %v656 = vmul.f32 %v613, %v619
        %v657 = vmul.f32 %v613, %v624
        %v658 = vmul.f32 %v613, %v629
        %v659 = vmul.f32 %v613, %v634
        %v660 = vmul.f32 %v614, %v619
        %v661 = vmul.f32 %v614, %v624
        %v662 = vmul.f32 %v614, %v629
        %v663 = vmul.f32 %v614, %v634
        %v664 = vmul.f32 %v615, %v619
        %v665 = vmul.f32 %v615, %v624
        %v666 = vmul.f32 %v615, %v629
        %v667 = vmul.f32 %v615, %v634
        %v668 = vperm.slane %v584, 1
        %v669 = vperm.slane %v585, 1
        %v670 = vperm.slane %v586, 1
        %v671 = vperm.slane %v587, 1
        %v672 = vperm.slane %v588, 1
        %v673 = vperm.slane %v589, 1
        %v674 = vperm.slane %v590, 1
        %v675 = vperm.slane %v591, 1
        %677 = vset.pattern.permute.xlu0 0
        %678 = vperm.xlu0 %677, %v596
        %v679 = vpop.permute.xlu0 %678
        %682 = vset.pattern.permute.xlu0 0
        %683 = vperm.xlu0 %682, %v597
        %v684 = vpop.permute.xlu0 %683
        %687 = vset.pattern.permute.xlu0 0
        %688 = vperm.xlu0 %687, %v598
        %v689 = vpop.permute.xlu0 %688
        %692 = vset.pattern.permute.xlu0 0
        %693 = vperm.xlu0 %692, %v599
        %v694 = vpop.permute.xlu0 %693
        %v696 = vmul.f32 %v668, %v679
        %v697 = vmul.f32 %v668, %v684
        %v698 = vmul.f32 %v668, %v689
        %v699 = vmul.f32 %v668, %v694
        %v700 = vmul.f32 %v669, %v679
        %v701 = vmul.f32 %v669, %v684
        %v702 = vmul.f32 %v669, %v689
        %v703 = vmul.f32 %v669, %v694
        %v704 = vmul.f32 %v670, %v679
        %v705 = vmul.f32 %v670, %v684
        %v706 = vmul.f32 %v670, %v689
        %v707 = vmul.f32 %v670, %v694
        %v708 = vmul.f32 %v671, %v679
        %v709 = vmul.f32 %v671, %v684
        %v710 = vmul.f32 %v671, %v689
        %v711 = vmul.f32 %v671, %v694
        %v712 = vmul.f32 %v672, %v679
        %v713 = vmul.f32 %v672, %v684
        %v714 = vmul.f32 %v672, %v689
        %v715 = vmul.f32 %v672, %v694
        %v716 = vmul.f32 %v673, %v679
        %v717 = vmul.f32 %v673, %v684
        %v718 = vmul.f32 %v673, %v689
        %v719 = vmul.f32 %v673, %v694
        %v720 = vmul.f32 %v674, %v679
        %v721 = vmul.f32 %v674, %v684
        %v722 = vmul.f32 %v674, %v689
        %v723 = vmul.f32 %v674, %v694
        %v724 = vmul.f32 %v675, %v679
        %v725 = vmul.f32 %v675, %v684
        %v726 = vmul.f32 %v675, %v689
        %v727 = vmul.f32 %v675, %v694
        %v728 = vadd.f32 %v636, %v696
        %v729 = vadd.f32 %v637, %v697
        %v730 = vadd.f32 %v638, %v698
        %v731 = vadd.f32 %v639, %v699
        %v732 = vadd.f32 %v640, %v700
        %v733 = vadd.f32 %v641, %v701
        %v734 = vadd.f32 %v642, %v702
        %v735 = vadd.f32 %v643, %v703
        %v736 = vadd.f32 %v644, %v704
        %v737 = vadd.f32 %v645, %v705
        %v738 = vadd.f32 %v646, %v706
        %v739 = vadd.f32 %v647, %v707
        %v740 = vadd.f32 %v648, %v708
        %v741 = vadd.f32 %v649, %v709
        %v742 = vadd.f32 %v650, %v710
        %v743 = vadd.f32 %v651, %v711
        %v744 = vadd.f32 %v652, %v712
        %v745 = vadd.f32 %v653, %v713
        %v746 = vadd.f32 %v654, %v714
        %v747 = vadd.f32 %v655, %v715
        %v748 = vadd.f32 %v656, %v716
        %v749 = vadd.f32 %v657, %v717
        %v750 = vadd.f32 %v658, %v718
        %v751 = vadd.f32 %v659, %v719
        %v752 = vadd.f32 %v660, %v720
        %v753 = vadd.f32 %v661, %v721
        %v754 = vadd.f32 %v662, %v722
        %v755 = vadd.f32 %v663, %v723
        %v756 = vadd.f32 %v664, %v724
        %v757 = vadd.f32 %v665, %v725
        %v758 = vadd.f32 %v666, %v726
        %v759 = vadd.f32 %v667, %v727
        %v760 = vperm.slane %v584, 2
        %v761 = vperm.slane %v585, 2
        %v762 = vperm.slane %v586, 2
        %v763 = vperm.slane %v587, 2
        %v764 = vperm.slane %v588, 2
        %v765 = vperm.slane %v589, 2
        %v766 = vperm.slane %v590, 2
        %v767 = vperm.slane %v591, 2
        %769 = vset.pattern.permute.xlu0 0
        %770 = vperm.xlu0 %769, %v600
        %v771 = vpop.permute.xlu0 %770
        %774 = vset.pattern.permute.xlu0 0
        %775 = vperm.xlu0 %774, %v601
        %v776 = vpop.permute.xlu0 %775
        %779 = vset.pattern.permute.xlu0 0
        %780 = vperm.xlu0 %779, %v602
        %v781 = vpop.permute.xlu0 %780
        %784 = vset.pattern.permute.xlu0 0
        %785 = vperm.xlu0 %784, %v603
        %v786 = vpop.permute.xlu0 %785
        %v788 = vmul.f32 %v760, %v771
        %v789 = vmul.f32 %v760, %v776
        %v790 = vmul.f32 %v760, %v781
        %v791 = vmul.f32 %v760, %v786
        %v792 = vmul.f32 %v761, %v771
        %v793 = vmul.f32 %v761, %v776
        %v794 = vmul.f32 %v761, %v781
        %v795 = vmul.f32 %v761, %v786
        %v796 = vmul.f32 %v762, %v771
        %v797 = vmul.f32 %v762, %v776
        %v798 = vmul.f32 %v762, %v781
        %v799 = vmul.f32 %v762, %v786
        %v800 = vmul.f32 %v763, %v771
        %v801 = vmul.f32 %v763, %v776
        %v802 = vmul.f32 %v763, %v781
        %v803 = vmul.f32 %v763, %v786
        %v804 = vmul.f32 %v764, %v771
        %v805 = vmul.f32 %v764, %v776
        %v806 = vmul.f32 %v764, %v781
        %v807 = vmul.f32 %v764, %v786
        %v808 = vmul.f32 %v765, %v771
        %v809 = vmul.f32 %v765, %v776
        %v810 = vmul.f32 %v765, %v781
        %v811 = vmul.f32 %v765, %v786
        %v812 = vmul.f32 %v766, %v771
        %v813 = vmul.f32 %v766, %v776
        %v814 = vmul.f32 %v766, %v781
        %v815 = vmul.f32 %v766, %v786
        %v816 = vmul.f32 %v767, %v771
        %v817 = vmul.f32 %v767, %v776
        %v818 = vmul.f32 %v767, %v781
        %v819 = vmul.f32 %v767, %v786
        %v820 = vadd.f32 %v728, %v788
        %v821 = vadd.f32 %v729, %v789
        %v822 = vadd.f32 %v730, %v790
        %v823 = vadd.f32 %v731, %v791
        %v824 = vadd.f32 %v732, %v792
        %v825 = vadd.f32 %v733, %v793
        %v826 = vadd.f32 %v734, %v794
        %v827 = vadd.f32 %v735, %v795
        %v828 = vadd.f32 %v736, %v796
        %v829 = vadd.f32 %v737, %v797
        %v830 = vadd.f32 %v738, %v798
        %v831 = vadd.f32 %v739, %v799
        %v832 = vadd.f32 %v740, %v800
        %v833 = vadd.f32 %v741, %v801
        %v834 = vadd.f32 %v742, %v802
        %v835 = vadd.f32 %v743, %v803
        %v836 = vadd.f32 %v744, %v804
        %v837 = vadd.f32 %v745, %v805
        %v838 = vadd.f32 %v746, %v806
        %v839 = vadd.f32 %v747, %v807
        %v840 = vadd.f32 %v748, %v808
        %v841 = vadd.f32 %v749, %v809
        %v842 = vadd.f32 %v750, %v810
        %v843 = vadd.f32 %v751, %v811
        %v844 = vadd.f32 %v752, %v812
        %v845 = vadd.f32 %v753, %v813
        %v846 = vadd.f32 %v754, %v814
        %v847 = vadd.f32 %v755, %v815
        %v848 = vadd.f32 %v756, %v816
        %v849 = vadd.f32 %v757, %v817
        %v850 = vadd.f32 %v758, %v818
        %v851 = vadd.f32 %v759, %v819
        %v852 = vperm.slane %v584, 3
        %v853 = vperm.slane %v585, 3
        %v854 = vperm.slane %v586, 3
        %v855 = vperm.slane %v587, 3
        %v856 = vperm.slane %v588, 3
        %v857 = vperm.slane %v589, 3
        %v858 = vperm.slane %v590, 3
        %v859 = vperm.slane %v591, 3
        %861 = vset.pattern.permute.xlu0 0
        %862 = vperm.xlu0 %861, %v604
        %v863 = vpop.permute.xlu0 %862
        %866 = vset.pattern.permute.xlu0 0
        %867 = vperm.xlu0 %866, %v605
        %v868 = vpop.permute.xlu0 %867
        %871 = vset.pattern.permute.xlu0 0
        %872 = vperm.xlu0 %871, %v606
        %v873 = vpop.permute.xlu0 %872
        %876 = vset.pattern.permute.xlu0 0
        %877 = vperm.xlu0 %876, %v607
        %v878 = vpop.permute.xlu0 %877
        %v880 = vmul.f32 %v852, %v863
        %v881 = vmul.f32 %v852, %v868
        %v882 = vmul.f32 %v852, %v873
        %v883 = vmul.f32 %v852, %v878
        %v884 = vmul.f32 %v853, %v863
        %v885 = vmul.f32 %v853, %v868
        %v886 = vmul.f32 %v853, %v873
        %v887 = vmul.f32 %v853, %v878
        %v888 = vmul.f32 %v854, %v863
        %v889 = vmul.f32 %v854, %v868
        %v890 = vmul.f32 %v854, %v873
        %v891 = vmul.f32 %v854, %v878
        %v892 = vmul.f32 %v855, %v863
        %v893 = vmul.f32 %v855, %v868
        %v894 = vmul.f32 %v855, %v873
        %v895 = vmul.f32 %v855, %v878
        %v896 = vmul.f32 %v856, %v863
        %v897 = vmul.f32 %v856, %v868
        %v898 = vmul.f32 %v856, %v873
        %v899 = vmul.f32 %v856, %v878
        %v900 = vmul.f32 %v857, %v863
        %v901 = vmul.f32 %v857, %v868
        %v902 = vmul.f32 %v857, %v873
        %v903 = vmul.f32 %v857, %v878
        %v904 = vmul.f32 %v858, %v863
        %v905 = vmul.f32 %v858, %v868
        %v906 = vmul.f32 %v858, %v873
        %v907 = vmul.f32 %v858, %v878
        %v908 = vmul.f32 %v859, %v863
        %v909 = vmul.f32 %v859, %v868
        %v910 = vmul.f32 %v859, %v873
        %v911 = vmul.f32 %v859, %v878
        %v912 = vadd.f32 %v820, %v880
        %v913 = vadd.f32 %v821, %v881
        %v914 = vadd.f32 %v822, %v882
        %v915 = vadd.f32 %v823, %v883
        %v916 = vadd.f32 %v824, %v884
        %v917 = vadd.f32 %v825, %v885
        %v918 = vadd.f32 %v826, %v886
        %v919 = vadd.f32 %v827, %v887
        %v920 = vadd.f32 %v828, %v888
        %v921 = vadd.f32 %v829, %v889
        %v922 = vadd.f32 %v830, %v890
        %v923 = vadd.f32 %v831, %v891
        %v924 = vadd.f32 %v832, %v892
        %v925 = vadd.f32 %v833, %v893
        %v926 = vadd.f32 %v834, %v894
        %v927 = vadd.f32 %v835, %v895
        %v928 = vadd.f32 %v836, %v896
        %v929 = vadd.f32 %v837, %v897
        %v930 = vadd.f32 %v838, %v898
        %v931 = vadd.f32 %v839, %v899
        %v932 = vadd.f32 %v840, %v900
        %v933 = vadd.f32 %v841, %v901
        %v934 = vadd.f32 %v842, %v902
        %v935 = vadd.f32 %v843, %v903
        %v936 = vadd.f32 %v844, %v904
        %v937 = vadd.f32 %v845, %v905
        %v938 = vadd.f32 %v846, %v906
        %v939 = vadd.f32 %v847, %v907
        %v940 = vadd.f32 %v848, %v908
        %v941 = vadd.f32 %v849, %v909
        %v942 = vadd.f32 %v850, %v910
        %v943 = vadd.f32 %v851, %v911
        %v944 = vmax.f32 %v912, 0.0
        %v945 = vmax.f32 %v913, 0.0
        %v946 = vmax.f32 %v914, 0.0
        %v947 = vmax.f32 %v915, 0.0
        %v948 = vmax.f32 %v916, 0.0
        %v949 = vmax.f32 %v917, 0.0
        %v950 = vmax.f32 %v918, 0.0
        %v951 = vmax.f32 %v919, 0.0
        %v952 = vmax.f32 %v920, 0.0
        %v953 = vmax.f32 %v921, 0.0
        %v954 = vmax.f32 %v922, 0.0
        %v955 = vmax.f32 %v923, 0.0
        %v956 = vmax.f32 %v924, 0.0
        %v957 = vmax.f32 %v925, 0.0
        %v958 = vmax.f32 %v926, 0.0
        %v959 = vmax.f32 %v927, 0.0
        %v960 = vmax.f32 %v928, 0.0
        %v961 = vmax.f32 %v929, 0.0
        %v962 = vmax.f32 %v930, 0.0
        %v963 = vmax.f32 %v931, 0.0
        %v964 = vmax.f32 %v932, 0.0
        %v965 = vmax.f32 %v933, 0.0
        %v966 = vmax.f32 %v934, 0.0
        %v967 = vmax.f32 %v935, 0.0
        %v968 = vmax.f32 %v936, 0.0
        %v969 = vmax.f32 %v937, 0.0
        %v970 = vmax.f32 %v938, 0.0
        %v971 = vmax.f32 %v939, 0.0
        %v972 = vmax.f32 %v940, 0.0
        %v973 = vmax.f32 %v941, 0.0
        %v974 = vmax.f32 %v942, 0.0
        %v975 = vmax.f32 %v943, 0.0
        %v976 = vld [vmem:[#allocation2] sm:$0xff]
        %977 = vadd.xlane.f32.xlu0 %v944
        %v978 = vpop.xlane.xlu0 %977
        %979 = vadd.xlane.f32.xlu0 %v945
        %v980 = vpop.xlane.xlu0 %979
        %981 = vadd.xlane.f32.xlu0 %v946
        %v982 = vpop.xlane.xlu0 %981
        %983 = vadd.xlane.f32.xlu0 %v947
        %v984 = vpop.xlane.xlu0 %983
        %985 = vadd.xlane.f32.xlu0 %v948
        %v986 = vpop.xlane.xlu0 %985
        %987 = vadd.xlane.f32.xlu0 %v949
        %v988 = vpop.xlane.xlu0 %987
        %989 = vadd.xlane.f32.xlu0 %v950
        %v990 = vpop.xlane.xlu0 %989
        %991 = vadd.xlane.f32.xlu0 %v951
        %v992 = vpop.xlane.xlu0 %991
        %993 = vadd.xlane.f32.xlu0 %v952
        %v994 = vpop.xlane.xlu0 %993
        %995 = vadd.xlane.f32.xlu0 %v953
        %v996 = vpop.xlane.xlu0 %995
        %997 = vadd.xlane.f32.xlu0 %v954
        %v998 = vpop.xlane.xlu0 %997
        %999 = vadd.xlane.f32.xlu0 %v955
        %v1000 = vpop.xlane.xlu0 %999
        %1001 = vadd.xlane.f32.xlu0 %v956
        %v1002 = vpop.xlane.xlu0 %1001
        %1003 = vadd.xlane.f32.xlu0 %v957
        %v1004 = vpop.xlane.xlu0 %1003
        %1005 = vadd.xlane.f32.xlu0 %v958
        %v1006 = vpop.xlane.xlu0 %1005
        %1007 = vadd.xlane.f32.xlu0 %v959
        %v1008 = vpop.xlane.xlu0 %1007
        %1009 = vadd.xlane.f32.xlu0 %v960
        %v1010 = vpop.xlane.xlu0 %1009
        %1011 = vadd.xlane.f32.xlu0 %v961
        %v1012 = vpop.xlane.xlu0 %1011
        %1013 = vadd.xlane.f32.xlu0 %v962
        %v1014 = vpop.xlane.xlu0 %1013
        %1015 = vadd.xlane.f32.xlu0 %v963
        %v1016 = vpop.xlane.xlu0 %1015
        %1017 = vadd.xlane.f32.xlu0 %v964
        %v1018 = vpop.xlane.xlu0 %1017
        %1019 = vadd.xlane.f32.xlu0 %v965
        %v1020 = vpop.xlane.xlu0 %1019
        %1021 = vadd.xlane.f32.xlu0 %v966
        %v1022 = vpop.xlane.xlu0 %1021
        %1023 = vadd.xlane.f32.xlu0 %v967
        %v1024 = vpop.xlane.xlu0 %1023
        %1025 = vadd.xlane.f32.xlu0 %v968
        %v1026 = vpop.xlane.xlu0 %1025
        %1027 = vadd.xlane.f32.xlu0 %v969
        %v1028 = vpop.xlane.xlu0 %1027
        %1029 = vadd.xlane.f32.xlu0 %v970
        %v1030 = vpop.xlane.xlu0 %1029
        %1031 = vadd.xlane.f32.xlu0 %v971
        %v1032 = vpop.xlane.xlu0 %1031
        %1033 = vadd.xlane.f32.xlu0 %v972
        %v1034 = vpop.xlane.xlu0 %1033
        %1035 = vadd.xlane.f32.xlu0 %v973
        %v1036 = vpop.xlane.xlu0 %1035
        %1037 = vadd.xlane.f32.xlu0 %v974
        %v1038 = vpop.xlane.xlu0 %1037
        %1039 = vadd.xlane.f32.xlu0 %v975
        %v1040 = vpop.xlane.xlu0 %1039
        %v1073 = vlaneseq
        %v1074 = vand.u32 %v1073, 127
        %v1075 = vperm.slane %v978, %v1074
        %v1076 = vadd.s32 %v1074, 4294967288
        %v1077 = vperm.slane %v980, %v1076
        %vm1078 = vcmask 130112
        %v1079 = vsel %vm1078, %v1077, %v1075
        %v1080 = vadd.s32 %v1074, 4294967280
        %v1081 = vperm.slane %v982, %v1080
        %vm1082 = vcmask 195712
        %v1083 = vsel %vm1082, %v1081, %v1079
        %v1084 = vadd.s32 %v1074, 4294967272
        %v1085 = vperm.slane %v984, %v1084
        %vm1086 = vcmask 261312
        %v1087 = vsel %vm1086, %v1085, %v1083
        %v1088 = vperm.slane %v986, %v1074
        %v1089 = vperm.slane %v988, %v1076
        %v1090 = vsel %vm1078, %v1089, %v1088
        %v1091 = vperm.slane %v990, %v1080
        %v1092 = vsel %vm1082, %v1091, %v1090
        %v1093 = vperm.slane %v992, %v1084
        %v1094 = vsel %vm1086, %v1093, %v1092
        %v1095 = vperm.slane %v994, %v1074
        %v1096 = vperm.slane %v996, %v1076
        %v1097 = vsel %vm1078, %v1096, %v1095
        %v1098 = vperm.slane %v998, %v1080
        %v1099 = vsel %vm1082, %v1098, %v1097
        %v1100 = vperm.slane %v1000, %v1084
        %v1101 = vsel %vm1086, %v1100, %v1099
        %v1102 = vperm.slane %v1002, %v1074
        %v1103 = vperm.slane %v1004, %v1076
        %v1104 = vsel %vm1078, %v1103, %v1102
        %v1105 = vperm.slane %v1006, %v1080
        %v1106 = vsel %vm1082, %v1105, %v1104
        %v1107 = vperm.slane %v1008, %v1084
        %v1108 = vsel %vm1086, %v1107, %v1106
        %v1109 = vperm.slane %v1010, %v1074
        %v1110 = vperm.slane %v1012, %v1076
        %v1111 = vsel %vm1078, %v1110, %v1109
        %v1112 = vperm.slane %v1014, %v1080
        %v1113 = vsel %vm1082, %v1112, %v1111
        %v1114 = vperm.slane %v1016, %v1084
        %v1115 = vsel %vm1086, %v1114, %v1113
        %v1116 = vperm.slane %v1018, %v1074
        %v1117 = vperm.slane %v1020, %v1076
        %v1118 = vsel %vm1078, %v1117, %v1116
        %v1119 = vperm.slane %v1022, %v1080
        %v1120 = vsel %vm1082, %v1119, %v1118
        %v1121 = vperm.slane %v1024, %v1084
        %v1122 = vsel %vm1086, %v1121, %v1120
        %v1123 = vperm.slane %v1026, %v1074
        %v1124 = vperm.slane %v1028, %v1076
        %v1125 = vsel %vm1078, %v1124, %v1123
        %v1126 = vperm.slane %v1030, %v1080
        %v1127 = vsel %vm1082, %v1126, %v1125
        %v1128 = vperm.slane %v1032, %v1084
        %v1129 = vsel %vm1086, %v1128, %v1127
        %v1130 = vperm.slane %v1034, %v1074
        %v1131 = vperm.slane %v1036, %v1076
        %v1132 = vsel %vm1078, %v1131, %v1130
        %v1133 = vperm.slane %v1038, %v1080
        %v1134 = vsel %vm1082, %v1133, %v1132
        %v1135 = vperm.slane %v1040, %v1084
        %v1136 = vsel %vm1086, %v1135, %v1134
        %vm1137 = vcmask 1041409
        %v1138 = vsel %vm1137, %v1094, %v1087
        %vm1139 = vcmask 1042434
        %v1140 = vsel %vm1139, %v1101, %v1138
        %vm1141 = vcmask 1043459
        %v1142 = vsel %vm1141, %v1108, %v1140
        %vm1143 = vcmask 1044484
        %v1144 = vsel %vm1143, %v1115, %v1142
        %vm1145 = vcmask 1045509
        %v1146 = vsel %vm1145, %v1122, %v1144
        %vm1147 = vcmask 1046534
        %v1148 = vsel %vm1147, %v1129, %v1146
        %vm1149 = vcmask 1047559
        %v1150 = vsel %vm1149, %v1136, %v1148
        %v1152 = vadd.f32 %v976, %v1150
        %vm1153 = vcmask 261120
        %1154 = vst.msk [vmem:[#allocation2] sm:$0xff] %vm1153, %v1152
        %p1155 = scmp.eq.s32.totalorder %s30, 1
        // Predicated region
        $region126: #{simsiam_forward.1} parent=116 // pred_check
          %p1156 = pneg %p1155
        $region127: #{simsiam_forward.1} parent=116 // pred_check_branch
          %1158 = sbr.rel (%p1156) target = $region129
        $region128: #{simsiam_forward.1} parent=116 // pred_region
          %v1159 = vld [vmem:[#allocation2] sm:$0xff]
          %v1160 = vmul.f32 %v1159, 0.00390625
          %v1161 = vld [vmem:[%s2] sm:$0xff]
          %v1162 = vld [vmem:[%s2 + $0x8] sm:$0xff]
          %v1163 = vld [vmem:[%s2 + $0x10] sm:$0xff]
          %v1164 = vld [vmem:[%s2 + $0x18] sm:$0xff]
          %v1166 = vsel %vm1153, %v1160, 0
          %1168 = vmatpush.msra.mxu0 0.0
          %1169 = vmatpush.msra.mxu0 0.0
          %1170 = vmatpush.msra.mxu0 0.0
          %1171 = vmatpush.msra.mxu0 0.0
          %1172 = vmatpush.msra.mxu0 0.0
          %1173 = vmatpush.msra.mxu0 0.0
          %1174 = vmatpush.msra.mxu0 0.0
          %1175 = vmatpush.msra.mxu0 0.0
          %1176 = vmatpush.msra.mxu0 0.0
          %1177 = vmatpush.msra.mxu0 0.0
          %1178 = vmatpush.msra.mxu0 0.0
          %1179 = vmatpush.msra.mxu0 0.0
          %1180 = vmatpush.msra.mxu0 %v1164
          %1181 = vmatpush.msra.mxu0 %v1163
          %1182 = vmatpush.msra.mxu0 %v1162
          %1183 = vmatpush.msra.mxu0 %v1161
          %1184 = vmatmul.f32.gmra.mxu0 %v1166
          %v1185 = vpop.f32.mrf.mxu0
          %v1186 = vadd.f32 0.0, %v1185
          %1187 = vdwg.mxu0
          %v1188 = vld [vmem:[%s3] sm:$0x1]
          %v1189 = vld [vmem:[%s4] sm:$0x1]
          %v1190 = vrot.slane %v1186, 4
          %v1191 = vadd.f32 %v1186, %v1190
          %v1192 = vrot.slane %v1191, 2
          %v1193 = vadd.f32 %v1191, %v1192
          %v1194 = vrot.slane %v1193, 1
          %v1195 = vadd.f32 %v1193, %v1194
          %v1196 = vrcp.pop 8.0
          %v1197 = vmul.f32 8.0, %v1196
          %v1198 = vsub.f32 1.0, %v1197
          %v1199 = vmul.f32 %v1196, %v1198
          %v1200 = vadd.f32 %v1196, %v1199
          %vm1201 = vweird.f32 %v1196
          %v1202 = vsel %vm1201, %v1196, %v1200
          %v1203 = vmul.f32 %v1195, %v1202
          %v1204 = vsub.f32 %v1186, %v1203
          %v1205 = vmul.f32 %v1204, %v1204
          %v1206 = vrot.slane %v1205, 4
          %v1207 = vadd.f32 %v1205, %v1206
          %v1208 = vrot.slane %v1207, 2
          %v1209 = vadd.f32 %v1207, %v1208
          %v1210 = vrot.slane %v1209, 1
          %v1211 = vadd.f32 %v1209, %v1210
          %v1212 = vmul.f32 %v1211, %v1202
          %v1213 = vadd.f32 %v1212, 1e-05
          %v1214 = vrsqrt.pop %v1213
          %v1215 = vmul.f32 %v1214, %v1213
          %v1216 = vmul.f32 %v1215, %v1214
          %v1217 = vmul.f32 0.5, %v1216
          %v1218 = vsub.f32 1.5, %v1217
          %v1219 = vmul.f32 %v1214, %v1218
          %vm1220 = vweird.f32 %v1213
          %vm1221 = vweird.f32 %v1214
          %vm1222 = vmor %vm1220, %vm1221
          %v1223 = vsel %vm1222, %v1214, %v1219
          %v1224 = vmul.f32 %v1204, %v1223
          %v1226 = vperm.slane %v1188, 0
          %v1228 = vmul.f32 %v1224, %v1226
          %v1230 = vperm.slane %v1189, 0
          %v1232 = vadd.f32 %v1228, %v1230
          %v1233 = vmax.f32 %v1232, 0.0
          %v1234 = vld [vmem:[%s5] sm:$0xff]
          %v1235 = vld [vmem:[%s5 + $0x8] sm:$0xff]
          %v1236 = vld [vmem:[%s5 + $0x10] sm:$0xff]
          %v1237 = vld [vmem:[%s5 + $0x18] sm:$0xff]
          %v1238 = vld [vmem:[%s5 + $0x20] sm:$0xff]
          %v1239 = vld [vmem:[%s5 + $0x28] sm:$0xff]
          %v1240 = vld [vmem:[%s5 + $0x30] sm:$0xff]
          %v1241 = vld [vmem:[%s5 + $0x38] sm:$0xff]
          %v1242 = vld [vmem:[%s5 + $0x40] sm:$0xff]
          %v1243 = vld [vmem:[%s5 + $0x48] sm:$0xff]
          %v1244 = vld [vmem:[%s5 + $0x50] sm:$0xff]
          %v1245 = vld [vmem:[%s5 + $0x58] sm:$0xff]
          %v1246 = vld [vmem:[%s5 + $0x60] sm:$0xff]
          %v1247 = vld [vmem:[%s5 + $0x68] sm:$0xff]
          %v1248 = vld [vmem:[%s5 + $0x70] sm:$0xff]
          %v1249 = vld [vmem:[%s5 + $0x78] sm:$0xff]
          %1250 = vmatpush.msra.mxu0 %v1249
          %1251 = vmatpush.msra.mxu0 %v1248
          %1252 = vmatpush.msra.mxu0 %v1247
          %1253 = vmatpush.msra.mxu0 %v1246
          %1254 = vmatpush.msra.mxu0 %v1245
          %1255 = vmatpush.msra.mxu0 %v1244
          %1256 = vmatpush.msra.mxu0 %v1243
          %1257 = vmatpush.msra.mxu0 %v1242
          %1258 = vmatpush.msra.mxu0 %v1241
          %1259 = vmatpush.msra.mxu0 %v1240
          %1260 = vmatpush.msra.mxu0 %v1239
          %1261 = vmatpush.msra.mxu0 %v1238
          %1262 = vmatpush.msra.mxu0 %v1237
          %1263 = vmatpush.msra.mxu0 %v1236
          %1264 = vmatpush.msra.mxu0 %v1235
          %1265 = vmatpush.msra.mxu0 %v1234
          %1266 = vmatmul.f32.gmra.mxu0 %v1233
          %v1267 = vpop.f32.mrf.mxu0
          %v1268 = vadd.f32 0.0, %v1267
          %1269 = vdwg.mxu0
          %v1270 = vld [vmem:[%s6] sm:$0x1]
          %v1271 = vld [vmem:[%s7] sm:$0x1]
          %v1272 = vrot.slane %v1268, 4
          %v1273 = vadd.f32 %v1268, %v1272
          %v1274 = vrot.slane %v1273, 2
          %v1275 = vadd.f32 %v1273, %v1274
          %v1276 = vrot.slane %v1275, 1
          %v1277 = vadd.f32 %v1275, %v1276
          %v1278 = vmul.f32 %v1277, %v1202
          %v1279 = vsub.f32 %v1268, %v1278
          %v1280 = vmul.f32 %v1279, %v1279
          %v1281 = vrot.slane %v1280, 4
          %v1282 = vadd.f32 %v1280, %v1281
          %v1283 = vrot.slane %v1282, 2
          %v1284 = vadd.f32 %v1282, %v1283
          %v1285 = vrot.slane %v1284, 1
          %v1286 = vadd.f32 %v1284, %v1285
          %v1287 = vmul.f32 %v1286, %v1202
          %v1288 = vadd.f32 %v1287, 1e-05
          %v1289 = vrsqrt.pop %v1288
          %v1290 = vmul.f32 %v1289, %v1288
          %v1291 = vmul.f32 %v1290, %v1289
          %v1292 = vmul.f32 0.5, %v1291
          %v1293 = vsub.f32 1.5, %v1292
          %v1294 = vmul.f32 %v1289, %v1293
          %vm1295 = vweird.f32 %v1288
          %vm1296 = vweird.f32 %v1289
          %vm1297 = vmor %vm1295, %vm1296
          %v1298 = vsel %vm1297, %v1289, %v1294
          %v1299 = vmul.f32 %v1279, %v1298
          %v1301 = vperm.slane %v1270, 0
          %v1303 = vmul.f32 %v1299, %v1301
          %v1305 = vperm.slane %v1271, 0
          %v1307 = vadd.f32 %v1303, %v1305
          %v1308 = vmax.f32 %v1307, 0.0
          %v1309 = vld [vmem:[%s8] sm:$0xff]
          %v1310 = vld [vmem:[%s8 + $0x8] sm:$0xff]
          %v1311 = vld [vmem:[%s8 + $0x10] sm:$0xff]
          %v1312 = vld [vmem:[%s8 + $0x18] sm:$0xff]
          %v1313 = vld [vmem:[%s8 + $0x20] sm:$0xff]
          %v1314 = vld [vmem:[%s8 + $0x28] sm:$0xff]
          %v1315 = vld [vmem:[%s8 + $0x30] sm:$0xff]
          %v1316 = vld [vmem:[%s8 + $0x38] sm:$0xff]
          %v1317 = vld [vmem:[%s8 + $0x40] sm:$0xff]
          %v1318 = vld [vmem:[%s8 + $0x48] sm:$0xff]
          %v1319 = vld [vmem:[%s8 + $0x50] sm:$0xff]
          %v1320 = vld [vmem:[%s8 + $0x58] sm:$0xff]
          %v1321 = vld [vmem:[%s8 + $0x60] sm:$0xff]
          %v1322 = vld [vmem:[%s8 + $0x68] sm:$0xff]
          %v1323 = vld [vmem:[%s8 + $0x70] sm:$0xff]
          %v1324 = vld [vmem:[%s8 + $0x78] sm:$0xff]
          %v1325 = vld [vmem:[%s9] sm:$0x1]
          %v1327 = vperm.slane %v1325, 0
          %1329 = vmatpush.msra.mxu0 %v1324
          %1330 = vmatpush.msra.mxu0 %v1323
          %1331 = vmatpush.msra.mxu0 %v1322
          %1332 = vmatpush.msra.mxu0 %v1321
          %1333 = vmatpush.msra.mxu0 %v1320
          %1334 = vmatpush.msra.mxu0 %v1319
          %1335 = vmatpush.msra.mxu0 %v1318
          %1336 = vmatpush.msra.mxu0 %v1317
          %1337 = vmatpush.msra.mxu0 %v1316
          %1338 = vmatpush.msra.mxu0 %v1315
          %1339 = vmatpush.msra.mxu0 %v1314
          %1340 = vmatpush.msra.mxu0 %v1313
          %1341 = vmatpush.msra.mxu0 %v1312
          %1342 = vmatpush.msra.mxu0 %v1311
          %1343 = vmatpush.msra.mxu0 %v1310
          %1344 = vmatpush.msra.mxu0 %v1309
          %1345 = vmatmul.f32.gmra.mxu0 %v1308
          %v1346 = vpop.f32.mrf.mxu0
          %v1347 = vadd.f32 %v1327, %v1346
          %1348 = vdwg.mxu0
          %v1349 = vrot.slane %v1347, 4
          %v1350 = vadd.f32 %v1347, %v1349
          %v1351 = vrot.slane %v1350, 2
          %v1352 = vadd.f32 %v1350, %v1351
          %v1353 = vrot.slane %v1352, 1
          %v1354 = vadd.f32 %v1352, %v1353
          %v1355 = vmul.f32 %v1354, %v1202
          %v1356 = vsub.f32 %v1347, %v1355
          %v1357 = vmul.f32 %v1356, %v1356
          %v1358 = vrot.slane %v1357, 4
          %v1359 = vadd.f32 %v1357, %v1358
          %v1360 = vrot.slane %v1359, 2
          %v1361 = vadd.f32 %v1359, %v1360
          %v1362 = vrot.slane %v1361, 1
          %v1363 = vadd.f32 %v1361, %v1362
          %v1364 = vmul.f32 %v1363, %v1202
          %v1365 = vadd.f32 %v1364, 1e-05
          %v1366 = vrsqrt.pop %v1365
          %v1367 = vmul.f32 %v1366, %v1365
          %v1368 = vmul.f32 %v1367, %v1366
          %v1369 = vmul.f32 0.5, %v1368
          %v1370 = vsub.f32 1.5, %v1369
          %v1371 = vmul.f32 %v1366, %v1370
          %vm1372 = vweird.f32 %v1365
          %vm1373 = vweird.f32 %v1366
          %vm1374 = vmor %vm1372, %vm1373
          %v1375 = vsel %vm1374, %v1366, %v1371
          %v1376 = vmul.f32 %v1356, %v1375
          %v1377 = vld [vmem:[%s10] sm:$0xff]
          %v1378 = vld [vmem:[%s10 + $0x8] sm:$0xff]
          %v1379 = vld [vmem:[%s10 + $0x10] sm:$0xff]
          %v1380 = vld [vmem:[%s10 + $0x18] sm:$0xff]
          %v1381 = vld [vmem:[%s10 + $0x20] sm:$0xff]
          %v1382 = vld [vmem:[%s10 + $0x28] sm:$0xff]
          %v1383 = vld [vmem:[%s10 + $0x30] sm:$0xff]
          %v1384 = vld [vmem:[%s10 + $0x38] sm:$0xff]
          %v1385 = vld [vmem:[%s10 + $0x40] sm:$0xff]
          %v1386 = vld [vmem:[%s10 + $0x48] sm:$0xff]
          %v1387 = vld [vmem:[%s10 + $0x50] sm:$0xff]
          %v1388 = vld [vmem:[%s10 + $0x58] sm:$0xff]
          %v1389 = vld [vmem:[%s10 + $0x60] sm:$0xff]
          %v1390 = vld [vmem:[%s10 + $0x68] sm:$0xff]
          %v1391 = vld [vmem:[%s10 + $0x70] sm:$0xff]
          %v1392 = vld [vmem:[%s10 + $0x78] sm:$0xff]
          %1393 = vmatpush.msra.mxu0 %v1392
          %1394 = vmatpush.msra.mxu0 %v1391
          %1395 = vmatpush.msra.mxu0 %v1390
          %1396 = vmatpush.msra.mxu0 %v1389
          %1397 = vmatpush.msra.mxu0 %v1388
          %1398 = vmatpush.msra.mxu0 %v1387
          %1399 = vmatpush.msra.mxu0 %v1386
          %1400 = vmatpush.msra.mxu0 %v1385
          %1401 = vmatpush.msra.mxu0 %v1384
          %1402 = vmatpush.msra.mxu0 %v1383
          %1403 = vmatpush.msra.mxu0 %v1382
          %1404 = vmatpush.msra.mxu0 %v1381
          %1405 = vmatpush.msra.mxu0 %v1380
          %1406 = vmatpush.msra.mxu0 %v1379
          %1407 = vmatpush.msra.mxu0 %v1378
          %1408 = vmatpush.msra.mxu0 %v1377
          %1409 = vmatmul.f32.gmra.mxu0 %v1376
          %v1410 = vpop.f32.mrf.mxu0
          %v1411 = vadd.f32 0.0, %v1410
          %1412 = vdwg.mxu0
          %v1413 = vld [vmem:[%s11] sm:$0x1]
          %v1414 = vld [vmem:[%s12] sm:$0x1]
          %v1415 = vrot.slane %v1411, 4
          %v1416 = vadd.f32 %v1411, %v1415
          %v1417 = vrot.slane %v1416, 2
          %v1418 = vadd.f32 %v1416, %v1417
          %v1419 = vrot.slane %v1418, 1
          %v1420 = vadd.f32 %v1418, %v1419
          %v1421 = vmul.f32 %v1420, %v1202
          %v1422 = vsub.f32 %v1411, %v1421
          %v1423 = vmul.f32 %v1422, %v1422
          %v1424 = vrot.slane %v1423, 4
          %v1425 = vadd.f32 %v1423, %v1424
          %v1426 = vrot.slane %v1425, 2
          %v1427 = vadd.f32 %v1425, %v1426
          %v1428 = vrot.slane %v1427, 1
          %v1429 = vadd.f32 %v1427, %v1428
          %v1430 = vmul.f32 %v1429, %v1202
          %v1431 = vadd.f32 %v1430, 1e-05
          %v1432 = vrsqrt.pop %v1431
          %v1433 = vmul.f32 %v1432, %v1431
          %v1434 = vmul.f32 %v1433, %v1432
          %v1435 = vmul.f32 0.5, %v1434
          %v1436 = vsub.f32 1.5, %v1435
          %v1437 = vmul.f32 %v1432, %v1436
          %vm1438 = vweird.f32 %v1431
          %vm1439 = vweird.f32 %v1432
          %vm1440 = vmor %vm1438, %vm1439
          %v1441 = vsel %vm1440, %v1432, %v1437
          %v1442 = vmul.f32 %v1422, %v1441
          %v1444 = vperm.slane %v1413, 0
          %v1446 = vmul.f32 %v1442, %v1444
          %v1448 = vperm.slane %v1414, 0
          %v1450 = vadd.f32 %v1446, %v1448
          %v1451 = vmax.f32 %v1450, 0.0
          %v1452 = vld [vmem:[%s13] sm:$0xff]
          %v1453 = vld [vmem:[%s13 + $0x8] sm:$0xff]
          %v1454 = vld [vmem:[%s13 + $0x10] sm:$0xff]
          %v1455 = vld [vmem:[%s13 + $0x18] sm:$0xff]
          %v1456 = vld [vmem:[%s13 + $0x20] sm:$0xff]
          %v1457 = vld [vmem:[%s13 + $0x28] sm:$0xff]
          %v1458 = vld [vmem:[%s13 + $0x30] sm:$0xff]
          %v1459 = vld [vmem:[%s13 + $0x38] sm:$0xff]
          %v1460 = vld [vmem:[%s13 + $0x40] sm:$0xff]
          %v1461 = vld [vmem:[%s13 + $0x48] sm:$0xff]
          %v1462 = vld [vmem:[%s13 + $0x50] sm:$0xff]
          %v1463 = vld [vmem:[%s13 + $0x58] sm:$0xff]
          %v1464 = vld [vmem:[%s13 + $0x60] sm:$0xff]
          %v1465 = vld [vmem:[%s13 + $0x68] sm:$0xff]
          %v1466 = vld [vmem:[%s13 + $0x70] sm:$0xff]
          %v1467 = vld [vmem:[%s13 + $0x78] sm:$0xff]
          %v1468 = vld [vmem:[%s14] sm:$0x1]
          %v1470 = vperm.slane %v1468, 0
          %1472 = vmatpush.msra.mxu0 %v1467
          %1473 = vmatpush.msra.mxu0 %v1466
          %1474 = vmatpush.msra.mxu0 %v1465
          %1475 = vmatpush.msra.mxu0 %v1464
          %1476 = vmatpush.msra.mxu0 %v1463
          %1477 = vmatpush.msra.mxu0 %v1462
          %1478 = vmatpush.msra.mxu0 %v1461
          %1479 = vmatpush.msra.mxu0 %v1460
          %1480 = vmatpush.msra.mxu0 %v1459
          %1481 = vmatpush.msra.mxu0 %v1458
          %1482 = vmatpush.msra.mxu0 %v1457
          %1483 = vmatpush.msra.mxu0 %v1456
          %1484 = vmatpush.msra.mxu0 %v1455
          %1485 = vmatpush.msra.mxu0 %v1454
          %1486 = vmatpush.msra.mxu0 %v1453
          %1487 = vmatpush.msra.mxu0 %v1452
          %1488 = vmatmul.f32.gmra.mxu0 %v1451
          %v1489 = vpop.f32.mrf.mxu0
          %v1490 = vadd.f32 %v1470, %v1489
          %1491 = vdwg.mxu0
          %1492 = vst [vmem:[#allocation4] sm:$0xff] %v1490
          %1493 = vst [vmem:[#allocation6] sm:$0xff] %v1376
        $region129: #{simsiam_forward.1} parent=116 // pred_fallthru
          _
        // Predicated region
        $region130: #{simsiam_forward.1} parent=116 // pred_check
          %p1494 = pneg %p363
        $region131: #{simsiam_forward.1} parent=116 // pred_check_branch
          %1496 = sbr.rel (%p1494) target = $region133
        $region132: #{simsiam_forward.1} parent=116 // pred_region
          %1498 = vsyncadd [#allocation5], 0
          %s1500 = sshll.u32 [#allocation4], 4
          %s1501 = int_to_ptr.vmem [resolvable:$true] %s1500
          %s1502 = sshll.u32 %s15, 4
          %s1503 = int_to_ptr.hbm [resolvable:$true] %s1502
          %1505 = dma.vmem_to_hbm [thread:$0]  %s1501, 128, %s1503, [#allocation5]
        $region133: #{simsiam_forward.1} parent=116 // pred_fallthru
          _
        // Predicated region
        $region134: #{simsiam_forward.1} parent=116 // pred_check
          %p1506 = pneg %p384
        $region135: #{simsiam_forward.1} parent=116 // pred_check_branch
          %1508 = sbr.rel (%p1506) target = $region137
        $region136: #{simsiam_forward.1} parent=116 // pred_region
          %1510 = vsyncadd [#allocation7], 0
          %s1512 = sshll.u32 [#allocation6], 4
          %s1513 = int_to_ptr.vmem [resolvable:$true] %s1512
          %s1514 = sshll.u32 %s16, 4
          %s1515 = int_to_ptr.hbm [resolvable:$true] %s1514
          %1517 = dma.vmem_to_hbm [thread:$0]  %s1513, 128, %s1515, [#allocation7]
        $region137: #{simsiam_forward.1} parent=116 // pred_fallthru
          _
        // Predicated region
        $region138: #{simsiam_forward.1} parent=116 // pred_check
          %p1518 = pneg %p363
        $region139: #{simsiam_forward.1} parent=116 // pred_check_branch
          %1520 = sbr.rel (%p1518) target = $region141
        $region140: #{simsiam_forward.1} parent=116 // pred_region
          %1522 = dma.done [#allocation5], 128
        $region141: #{simsiam_forward.1} parent=116 // pred_fallthru
          _
        // Predicated region
        $region142: #{simsiam_forward.1} parent=116 // pred_check
          %p1523 = pneg %p384
        $region143: #{simsiam_forward.1} parent=116 // pred_check_branch
          %1525 = sbr.rel (%p1523) target = $region145
        $region144: #{simsiam_forward.1} parent=116 // pred_region
          %1527 = dma.done [#allocation7], 128
        $region145: #{simsiam_forward.1} parent=116 // pred_fallthru
          _
      $region117: #{simsiam_forward.1} parent=5 // pred_fallthru
        _
      %p1528 = scmp.le.s32.totalorder 2, %s25
      // Predicated region
      $region146: #{simsiam_forward.1} parent=5 // pred_check
        %p1529 = pneg %p1528
      $region147: #{simsiam_forward.1} parent=5 // pred_check_branch
        %1531 = sbr.rel (%p1529) target = $region149
      $region148: #{simsiam_forward.1} parent=5 // pred_region
        %s1532 = ssub.s32 %s25, 2
      $region149: #{simsiam_forward.1} parent=5 // pred_fallthru
        _
    $region6: #{simsiam_forward.1} parent=1 // loop_footer
      %s29 = sadd.s32 1, %s25
    $region7: #{simsiam_forward.1} parent=1 // loop_footer_branch
      %24 = sbr.rel target = $region3
    $region8: #{simsiam_forward.1} parent=1 // loop_exit
      _
    %1533 = vsyncpa [#allocation5], 1
    %s1534 = scalar_lea.sflag [#allocation5], 1
    %1535 = vsyncpa %s1534, 1
    %1536 = vsyncpa [#allocation7], 1

</llo_original>
